<compile_context>
chip_gen: v5e
topology: v5e:2x2
jax: 0.10.0
libtpu: 0.0.40
codegen_flags: <defaults>
</compile_context>

<pallas_src>
import jax
import jax.numpy as jnp
from jax.experimental import pallas as pl
from jax.experimental.pallas import tpu as pltpu

LAYER_DIMS = [784, 256, 128, 64, 32, 16, 32, 64, 128, 256, 784]
NUM_LAYERS = len(LAYER_DIMS) - 1  # 10


def _round_up(x, m):
    return (x + m - 1) // m * m


def _cdiv(a, b):
    return -(-a // b)


def _pick_batch_tile(B, max_tile=512):
    """Latency path: one tile sized to the batch. Throughput path: >=2 grid steps
    (keeps both v7x TensorCores busy via the 'parallel' axis), tiles up to 512 rows."""
    Bq = _round_up(max(B, 1), 16)          # bf16 sublane packing
    if Bq < 256:
        return Bq                          # single tile, at most 15 padded rows
    n_tiles = max(2, _cdiv(Bq, max_tile))  # guarantee grid >= 2 for v7x megacore
    return _round_up(_cdiv(Bq, n_tiles), 16)


def _sae_kernel(x_ref, *refs):
    """Fused forward: 10 x (bf16 matmul -> f32 acc -> +bias -> ReLU), all in VMEM.

    refs = (w1, b1, w2, b2, ..., w10, b10, out_ref)
    """
    out_ref = refs[-1]
    wb = refs[:-1]

    h = x_ref[...].astype(jnp.bfloat16)      # (TB, 784): in-kernel cast for the MXU
    for layer in range(NUM_LAYERS):
        w = wb[2 * layer][...]               # (din, dout) bf16
        b = wb[2 * layer + 1][...]           # (1, dout)   f32
        acc = jnp.dot(h, w, preferred_element_type=jnp.float32) + b
        acc = jnp.maximum(acc, 0.0)          # ReLU in f32
        if layer + 1 < NUM_LAYERS:
            h = acc.astype(jnp.bfloat16)     # bf16 operands for the next MXU pass
        else:
            out_ref[...] = acc.astype(out_ref.dtype)


def prepare_params(params):
    """One-time (outside-jit) prep: weights -> bf16, biases -> f32 (1, dout)."""
    kern_params = []
    for layer in range(NUM_LAYERS):
        w, b = params[2 * layer], params[2 * layer + 1]
        kern_params.append(jnp.asarray(w, jnp.bfloat16))
        kern_params.append(jnp.asarray(b, jnp.float32).reshape(1, -1))
    return kern_params


@jax.jit
def sparse_autoencoder_forward(x, kern_params):
    """x: (B, 784) float32.  kern_params: output of prepare_params() (bf16 W, f32 b)."""
    B, D = x.shape
    assert D == LAYER_DIMS[0]

    batch_tile = _pick_batch_tile(B)
    Bp = _round_up(max(B, 1), batch_tile)
    xp = x if Bp == B else jnp.pad(x, ((0, Bp - B), (0, 0)))   # batch-axis pad only
    grid = (Bp // batch_tile,)

    # Input / output tiled over batch only; weights & biases are full constant blocks
    # (constant index_map => DMA'd once, resident across the whole grid).
    # TODO(synk): pipeline_mode=pl.Buffered(1) on the weight/bias specs would drop the
    # unused second pipeline buffer (~0.6 MiB VMEM); left at default for lowering safety.
    in_specs = [pl.BlockSpec((batch_tile, D), lambda i: (i, 0))]
    for layer in range(NUM_LAYERS):
        din, dout = LAYER_DIMS[layer], LAYER_DIMS[layer + 1]
        in_specs.append(pl.BlockSpec((din, dout), lambda i: (0, 0)))   # weight
        in_specs.append(pl.BlockSpec((1, dout), lambda i: (0, 0)))     # bias
    out_spec = pl.BlockSpec((batch_tile, D), lambda i: (i, 0))

    # Scheduler hint: ~2 * B * sum(din*dout) FLOPs, activation + weight traffic.
    macs = sum(LAYER_DIMS[l] * LAYER_DIMS[l + 1] for l in range(NUM_LAYERS))
    weight_bytes = sum(
        2 * LAYER_DIMS[l] * LAYER_DIMS[l + 1] + 4 * LAYER_DIMS[l + 1]
        for l in range(NUM_LAYERS)
    )
    cost = pl.CostEstimate(
        flops=2 * Bp * macs,
        transcendentals=0,
        bytes_accessed=Bp * D * (4 + 4) + weight_bytes,
    )

    out = pl.pallas_call(
        _sae_kernel,
        out_shape=jax.ShapeDtypeStruct((Bp, D), jnp.float32),
        grid_spec=pltpu.PrefetchScalarGridSpec(
            num_scalar_prefetch=0,
            grid=grid,
            in_specs=in_specs,
            out_specs=out_spec,
        ),
        compiler_params=pltpu.CompilerParams(
            dimension_semantics=("parallel",),      # batch axis shards over v7x's 2 TCs
            vmem_limit_bytes=48 * 1024 * 1024,      # headroom; < 64 MiB (v7x physical)
        ),
        cost_estimate=cost,
    )(xp, *kern_params)

    return out[:B]   # drop zero-padded batch rows (they hold relu(bias), not zeros)


def init_params(key):
    """PyTorch-style uniform +-1/sqrt(fan_in). Weights stored (in,out) == nn.Linear.weight.T."""
    params = []
    for layer in range(NUM_LAYERS):
        din, dout = LAYER_DIMS[layer], LAYER_DIMS[layer + 1]
        key, kw, kb = jax.random.split(key, 3)
        bound = 1.0 / jnp.sqrt(jnp.float32(din))
        w = jax.random.uniform(kw, (din, dout), jnp.float32, -bound, bound)
        b = jax.random.uniform(kb, (1, dout), jnp.float32, -bound, bound)
        params += [w, b]
    return params


def reference_forward(x, params):
    """Plain-JAX reference with the same bf16-operand / f32-accumulate numerics."""
    h = x.astype(jnp.bfloat16)
    for layer in range(NUM_LAYERS):
        w, b = params[2 * layer], params[2 * layer + 1]
        acc = jnp.dot(h, w.astype(jnp.bfloat16), preferred_element_type=jnp.float32) + b
        acc = jnp.maximum(acc, 0.0)
        h = acc.astype(jnp.bfloat16) if layer + 1 < NUM_LAYERS else acc
    return h


if __name__ == "__main__":
    key = jax.random.PRNGKey(0)
    key, kx = jax.random.split(key)

    B = 8  # small demo batch; tile is sized to the batch (16 rows), not padded to 256
    x = jax.random.normal(kx, (B, 784), dtype=jnp.float32)
    params = init_params(key)
    kern_params = prepare_params(params)   # one-time weight prep, outside jit

    out = jax.block_until_ready(sparse_autoencoder_forward(x, kern_params))
    ref = jax.block_until_ready(reference_forward(x, params))

    assert out.shape == (B, 784), out.shape
    assert jnp.allclose(out, ref, atol=2e-2, rtol=2e-2), float(jnp.max(jnp.abs(out - ref)))

    print("KERNEL_OK")
</pallas_src>

<mosaic_0001>
module attributes {stable_mosaic.version = 11 : i64} {
  func.func @_sae_kernel(%arg0: i32, %arg1: memref<16x784xf32, #tpu.memory_space<vmem>>, %arg2: memref<784x256xbf16, #tpu.memory_space<vmem>>, %arg3: memref<1x256xf32, #tpu.memory_space<vmem>>, %arg4: memref<256x128xbf16, #tpu.memory_space<vmem>>, %arg5: memref<1x128xf32, #tpu.memory_space<vmem>>, %arg6: memref<128x64xbf16, #tpu.memory_space<vmem>>, %arg7: memref<1x64xf32, #tpu.memory_space<vmem>>, %arg8: memref<64x32xbf16, #tpu.memory_space<vmem>>, %arg9: memref<1x32xf32, #tpu.memory_space<vmem>>, %arg10: memref<32x16xbf16, #tpu.memory_space<vmem>>, %arg11: memref<1x16xf32, #tpu.memory_space<vmem>>, %arg12: memref<16x32xbf16, #tpu.memory_space<vmem>>, %arg13: memref<1x32xf32, #tpu.memory_space<vmem>>, %arg14: memref<32x64xbf16, #tpu.memory_space<vmem>>, %arg15: memref<1x64xf32, #tpu.memory_space<vmem>>, %arg16: memref<64x128xbf16, #tpu.memory_space<vmem>>, %arg17: memref<1x128xf32, #tpu.memory_space<vmem>>, %arg18: memref<128x256xbf16, #tpu.memory_space<vmem>>, %arg19: memref<1x256xf32, #tpu.memory_space<vmem>>, %arg20: memref<256x784xbf16, #tpu.memory_space<vmem>>, %arg21: memref<1x784xf32, #tpu.memory_space<vmem>>, %arg22: memref<16x784xf32, #tpu.memory_space<vmem>>) attributes {dimension_semantics = [#tpu.dimension_semantics<parallel>], iteration_bounds = array<i64: 1>, scalar_prefetch = 0 : i64, scratch_operands = 0 : i64, tpu.core_type = #tpu.core_type<tc>, window_params = [{transform_indices = @transform_0, window_bounds = array<i64: 16, 784>}, {pipeline_mode = #tpu.pipeline_mode<synchronous>, transform_indices = @transform_1, window_bounds = array<i64: 784, 256>}, {pipeline_mode = #tpu.pipeline_mode<synchronous>, transform_indices = @transform_2, window_bounds = array<i64: 1, 256>}, {pipeline_mode = #tpu.pipeline_mode<synchronous>, transform_indices = @transform_3, window_bounds = array<i64: 256, 128>}, {pipeline_mode = #tpu.pipeline_mode<synchronous>, transform_indices = @transform_4, window_bounds = array<i64: 1, 128>}, {pipeline_mode = #tpu.pipeline_mode<synchronous>, transform_indices = @transform_5, window_bounds = array<i64: 128, 64>}, {pipeline_mode = #tpu.pipeline_mode<synchronous>, transform_indices = @transform_6, window_bounds = array<i64: 1, 64>}, {pipeline_mode = #tpu.pipeline_mode<synchronous>, transform_indices = @transform_7, window_bounds = array<i64: 64, 32>}, {pipeline_mode = #tpu.pipeline_mode<synchronous>, transform_indices = @transform_8, window_bounds = array<i64: 1, 32>}, {pipeline_mode = #tpu.pipeline_mode<synchronous>, transform_indices = @transform_9, window_bounds = array<i64: 32, 16>}, {pipeline_mode = #tpu.pipeline_mode<synchronous>, transform_indices = @transform_10, window_bounds = array<i64: 1, 16>}, {pipeline_mode = #tpu.pipeline_mode<synchronous>, transform_indices = @transform_11, window_bounds = array<i64: 16, 32>}, {pipeline_mode = #tpu.pipeline_mode<synchronous>, transform_indices = @transform_12, window_bounds = array<i64: 1, 32>}, {pipeline_mode = #tpu.pipeline_mode<synchronous>, transform_indices = @transform_13, window_bounds = array<i64: 32, 64>}, {pipeline_mode = #tpu.pipeline_mode<synchronous>, transform_indices = @transform_14, window_bounds = array<i64: 1, 64>}, {pipeline_mode = #tpu.pipeline_mode<synchronous>, transform_indices = @transform_15, window_bounds = array<i64: 64, 128>}, {pipeline_mode = #tpu.pipeline_mode<synchronous>, transform_indices = @transform_16, window_bounds = array<i64: 1, 128>}, {pipeline_mode = #tpu.pipeline_mode<synchronous>, transform_indices = @transform_17, window_bounds = array<i64: 128, 256>}, {pipeline_mode = #tpu.pipeline_mode<synchronous>, transform_indices = @transform_18, window_bounds = array<i64: 1, 256>}, {pipeline_mode = #tpu.pipeline_mode<synchronous>, transform_indices = @transform_19, window_bounds = array<i64: 256, 784>}, {pipeline_mode = #tpu.pipeline_mode<synchronous>, transform_indices = @transform_20, window_bounds = array<i64: 1, 784>}, {transform_indices = @transform_21, window_bounds = array<i64: 16, 784>}]} {
    %c0 = arith.constant 0 : index
    %c0_0 = arith.constant 0 : index
    %0 = vector.load %arg1[%c0, %c0_0] : memref<16x784xf32, #tpu.memory_space<vmem>>, vector<16x784xf32>
    %1 = arith.truncf %0 : vector<16x784xf32> to vector<16x784xbf16>
    %c0_1 = arith.constant 0 : index
    %c0_2 = arith.constant 0 : index
    %2 = vector.load %arg2[%c0_1, %c0_2] : memref<784x256xbf16, #tpu.memory_space<vmem>>, vector<784x256xbf16>
    %c0_3 = arith.constant 0 : index
    %c0_4 = arith.constant 0 : index
    %3 = vector.load %arg3[%c0_3, %c0_4] : memref<1x256xf32, #tpu.memory_space<vmem>>, vector<1x256xf32>
    %cst = arith.constant dense<0.000000e+00> : vector<16x256xf32>
    %4 = tpu.matmul %1, %2, %cst {dimension_numbers = #tpu.dot_dimension_numbers<[1], [0], [0], [1], [0, 0, 1, 1], [], []>} : vector<16x784xbf16>, vector<784x256xbf16>, vector<16x256xf32> -> vector<16x256xf32>
    %5 = vector.broadcast %3 : vector<1x256xf32> to vector<16x256xf32>
    %6 = arith.addf %4, %5 : vector<16x256xf32>
    %cst_5 = arith.constant 0.000000e+00 : f32
    %7 = vector.broadcast %cst_5 : f32 to vector<16x256xf32>
    %8 = arith.maximumf %6, %7 : vector<16x256xf32>
    %9 = arith.truncf %8 : vector<16x256xf32> to vector<16x256xbf16>
    %c0_6 = arith.constant 0 : index
    %c0_7 = arith.constant 0 : index
    %10 = vector.load %arg4[%c0_6, %c0_7] : memref<256x128xbf16, #tpu.memory_space<vmem>>, vector<256x128xbf16>
    %c0_8 = arith.constant 0 : index
    %c0_9 = arith.constant 0 : index
    %11 = vector.load %arg5[%c0_8, %c0_9] : memref<1x128xf32, #tpu.memory_space<vmem>>, vector<1x128xf32>
    %cst_10 = arith.constant dense<0.000000e+00> : vector<16x128xf32>
    %12 = tpu.matmul %9, %10, %cst_10 {dimension_numbers = #tpu.dot_dimension_numbers<[1], [0], [0], [1], [0, 0, 1, 1], [], []>} : vector<16x256xbf16>, vector<256x128xbf16>, vector<16x128xf32> -> vector<16x128xf32>
    %13 = vector.broadcast %11 : vector<1x128xf32> to vector<16x128xf32>
    %14 = arith.addf %12, %13 : vector<16x128xf32>
    %cst_11 = arith.constant 0.000000e+00 : f32
    %15 = vector.broadcast %cst_11 : f32 to vector<16x128xf32>
    %16 = arith.maximumf %14, %15 : vector<16x128xf32>
    %17 = arith.truncf %16 : vector<16x128xf32> to vector<16x128xbf16>
    %c0_12 = arith.constant 0 : index
    %c0_13 = arith.constant 0 : index
    %18 = vector.load %arg6[%c0_12, %c0_13] : memref<128x64xbf16, #tpu.memory_space<vmem>>, vector<128x64xbf16>
    %c0_14 = arith.constant 0 : index
    %c0_15 = arith.constant 0 : index
    %19 = vector.load %arg7[%c0_14, %c0_15] : memref<1x64xf32, #tpu.memory_space<vmem>>, vector<1x64xf32>
    %cst_16 = arith.constant dense<0.000000e+00> : vector<16x64xf32>
    %20 = tpu.matmul %17, %18, %cst_16 {dimension_numbers = #tpu.dot_dimension_numbers<[1], [0], [0], [1], [0, 0, 1, 1], [], []>} : vector<16x128xbf16>, vector<128x64xbf16>, vector<16x64xf32> -> vector<16x64xf32>
    %21 = vector.broadcast %19 : vector<1x64xf32> to vector<16x64xf32>
    %22 = arith.addf %20, %21 : vector<16x64xf32>
    %cst_17 = arith.constant 0.000000e+00 : f32
    %23 = vector.broadcast %cst_17 : f32 to vector<16x64xf32>
    %24 = arith.maximumf %22, %23 : vector<16x64xf32>
    %25 = arith.truncf %24 : vector<16x64xf32> to vector<16x64xbf16>
    %c0_18 = arith.constant 0 : index
    %c0_19 = arith.constant 0 : index
    %26 = vector.load %arg8[%c0_18, %c0_19] : memref<64x32xbf16, #tpu.memory_space<vmem>>, vector<64x32xbf16>
    %c0_20 = arith.constant 0 : index
    %c0_21 = arith.constant 0 : index
    %27 = vector.load %arg9[%c0_20, %c0_21] : memref<1x32xf32, #tpu.memory_space<vmem>>, vector<1x32xf32>
    %cst_22 = arith.constant dense<0.000000e+00> : vector<16x32xf32>
    %28 = tpu.matmul %25, %26, %cst_22 {dimension_numbers = #tpu.dot_dimension_numbers<[1], [0], [0], [1], [0, 0, 1, 1], [], []>} : vector<16x64xbf16>, vector<64x32xbf16>, vector<16x32xf32> -> vector<16x32xf32>
    %29 = vector.broadcast %27 : vector<1x32xf32> to vector<16x32xf32>
    %30 = arith.addf %28, %29 : vector<16x32xf32>
    %cst_23 = arith.constant 0.000000e+00 : f32
    %31 = vector.broadcast %cst_23 : f32 to vector<16x32xf32>
    %32 = arith.maximumf %30, %31 : vector<16x32xf32>
    %33 = arith.truncf %32 : vector<16x32xf32> to vector<16x32xbf16>
    %c0_24 = arith.constant 0 : index
    %c0_25 = arith.constant 0 : index
    %34 = vector.load %arg10[%c0_24, %c0_25] : memref<32x16xbf16, #tpu.memory_space<vmem>>, vector<32x16xbf16>
    %c0_26 = arith.constant 0 : index
    %c0_27 = arith.constant 0 : index
    %35 = vector.load %arg11[%c0_26, %c0_27] : memref<1x16xf32, #tpu.memory_space<vmem>>, vector<1x16xf32>
    %cst_28 = arith.constant dense<0.000000e+00> : vector<16x16xf32>
    %36 = tpu.matmul %33, %34, %cst_28 {dimension_numbers = #tpu.dot_dimension_numbers<[1], [0], [0], [1], [0, 0, 1, 1], [], []>} : vector<16x32xbf16>, vector<32x16xbf16>, vector<16x16xf32> -> vector<16x16xf32>
    %37 = vector.broadcast %35 : vector<1x16xf32> to vector<16x16xf32>
    %38 = arith.addf %36, %37 : vector<16x16xf32>
    %cst_29 = arith.constant 0.000000e+00 : f32
    %39 = vector.broadcast %cst_29 : f32 to vector<16x16xf32>
    %40 = arith.maximumf %38, %39 : vector<16x16xf32>
    %41 = arith.truncf %40 : vector<16x16xf32> to vector<16x16xbf16>
    %c0_30 = arith.constant 0 : index
    %c0_31 = arith.constant 0 : index
    %42 = vector.load %arg12[%c0_30, %c0_31] : memref<16x32xbf16, #tpu.memory_space<vmem>>, vector<16x32xbf16>
    %c0_32 = arith.constant 0 : index
    %c0_33 = arith.constant 0 : index
    %43 = vector.load %arg13[%c0_32, %c0_33] : memref<1x32xf32, #tpu.memory_space<vmem>>, vector<1x32xf32>
    %cst_34 = arith.constant dense<0.000000e+00> : vector<16x32xf32>
    %44 = tpu.matmul %41, %42, %cst_34 {dimension_numbers = #tpu.dot_dimension_numbers<[1], [0], [0], [1], [0, 0, 1, 1], [], []>} : vector<16x16xbf16>, vector<16x32xbf16>, vector<16x32xf32> -> vector<16x32xf32>
    %45 = vector.broadcast %43 : vector<1x32xf32> to vector<16x32xf32>
    %46 = arith.addf %44, %45 : vector<16x32xf32>
    %cst_35 = arith.constant 0.000000e+00 : f32
    %47 = vector.broadcast %cst_35 : f32 to vector<16x32xf32>
    %48 = arith.maximumf %46, %47 : vector<16x32xf32>
    %49 = arith.truncf %48 : vector<16x32xf32> to vector<16x32xbf16>
    %c0_36 = arith.constant 0 : index
    %c0_37 = arith.constant 0 : index
    %50 = vector.load %arg14[%c0_36, %c0_37] : memref<32x64xbf16, #tpu.memory_space<vmem>>, vector<32x64xbf16>
    %c0_38 = arith.constant 0 : index
    %c0_39 = arith.constant 0 : index
    %51 = vector.load %arg15[%c0_38, %c0_39] : memref<1x64xf32, #tpu.memory_space<vmem>>, vector<1x64xf32>
    %cst_40 = arith.constant dense<0.000000e+00> : vector<16x64xf32>
    %52 = tpu.matmul %49, %50, %cst_40 {dimension_numbers = #tpu.dot_dimension_numbers<[1], [0], [0], [1], [0, 0, 1, 1], [], []>} : vector<16x32xbf16>, vector<32x64xbf16>, vector<16x64xf32> -> vector<16x64xf32>
    %53 = vector.broadcast %51 : vector<1x64xf32> to vector<16x64xf32>
    %54 = arith.addf %52, %53 : vector<16x64xf32>
    %cst_41 = arith.constant 0.000000e+00 : f32
    %55 = vector.broadcast %cst_41 : f32 to vector<16x64xf32>
    %56 = arith.maximumf %54, %55 : vector<16x64xf32>
    %57 = arith.truncf %56 : vector<16x64xf32> to vector<16x64xbf16>
    %c0_42 = arith.constant 0 : index
    %c0_43 = arith.constant 0 : index
    %58 = vector.load %arg16[%c0_42, %c0_43] : memref<64x128xbf16, #tpu.memory_space<vmem>>, vector<64x128xbf16>
    %c0_44 = arith.constant 0 : index
    %c0_45 = arith.constant 0 : index
    %59 = vector.load %arg17[%c0_44, %c0_45] : memref<1x128xf32, #tpu.memory_space<vmem>>, vector<1x128xf32>
    %cst_46 = arith.constant dense<0.000000e+00> : vector<16x128xf32>
    %60 = tpu.matmul %57, %58, %cst_46 {dimension_numbers = #tpu.dot_dimension_numbers<[1], [0], [0], [1], [0, 0, 1, 1], [], []>} : vector<16x64xbf16>, vector<64x128xbf16>, vector<16x128xf32> -> vector<16x128xf32>
    %61 = vector.broadcast %59 : vector<1x128xf32> to vector<16x128xf32>
    %62 = arith.addf %60, %61 : vector<16x128xf32>
    %cst_47 = arith.constant 0.000000e+00 : f32
    %63 = vector.broadcast %cst_47 : f32 to vector<16x128xf32>
    %64 = arith.maximumf %62, %63 : vector<16x128xf32>
    %65 = arith.truncf %64 : vector<16x128xf32> to vector<16x128xbf16>
    %c0_48 = arith.constant 0 : index
    %c0_49 = arith.constant 0 : index
    %66 = vector.load %arg18[%c0_48, %c0_49] : memref<128x256xbf16, #tpu.memory_space<vmem>>, vector<128x256xbf16>
    %c0_50 = arith.constant 0 : index
    %c0_51 = arith.constant 0 : index
    %67 = vector.load %arg19[%c0_50, %c0_51] : memref<1x256xf32, #tpu.memory_space<vmem>>, vector<1x256xf32>
    %cst_52 = arith.constant dense<0.000000e+00> : vector<16x256xf32>
    %68 = tpu.matmul %65, %66, %cst_52 {dimension_numbers = #tpu.dot_dimension_numbers<[1], [0], [0], [1], [0, 0, 1, 1], [], []>} : vector<16x128xbf16>, vector<128x256xbf16>, vector<16x256xf32> -> vector<16x256xf32>
    %69 = vector.broadcast %67 : vector<1x256xf32> to vector<16x256xf32>
    %70 = arith.addf %68, %69 : vector<16x256xf32>
    %cst_53 = arith.constant 0.000000e+00 : f32
    %71 = vector.broadcast %cst_53 : f32 to vector<16x256xf32>
    %72 = arith.maximumf %70, %71 : vector<16x256xf32>
    %73 = arith.truncf %72 : vector<16x256xf32> to vector<16x256xbf16>
    %c0_54 = arith.constant 0 : index
    %c0_55 = arith.constant 0 : index
    %74 = vector.load %arg20[%c0_54, %c0_55] : memref<256x784xbf16, #tpu.memory_space<vmem>>, vector<256x784xbf16>
    %c0_56 = arith.constant 0 : index
    %c0_57 = arith.constant 0 : index
    %75 = vector.load %arg21[%c0_56, %c0_57] : memref<1x784xf32, #tpu.memory_space<vmem>>, vector<1x784xf32>
    %cst_58 = arith.constant dense<0.000000e+00> : vector<16x784xf32>
    %76 = tpu.matmul %73, %74, %cst_58 {dimension_numbers = #tpu.dot_dimension_numbers<[1], [0], [0], [1], [0, 0, 1, 1], [], []>} : vector<16x256xbf16>, vector<256x784xbf16>, vector<16x784xf32> -> vector<16x784xf32>
    %77 = vector.broadcast %75 : vector<1x784xf32> to vector<16x784xf32>
    %78 = arith.addf %76, %77 : vector<16x784xf32>
    %cst_59 = arith.constant 0.000000e+00 : f32
    %79 = vector.broadcast %cst_59 : f32 to vector<16x784xf32>
    %80 = arith.maximumf %78, %79 : vector<16x784xf32>
    %c0_60 = arith.constant 0 : index
    %c0_61 = arith.constant 0 : index
    %81 = vector.load %arg22[%c0_60, %c0_61] : memref<16x784xf32, #tpu.memory_space<vmem>>, vector<16x784xf32>
    tpu.vector_store %arg22[%c0_60, %c0_61], %80 {strides = array<i32>} : memref<16x784xf32, #tpu.memory_space<vmem>>, vector<16x784xf32>,
    return
  }
  func.func @transform_0(%arg0: i32) -> (i32, i32) {
    %c0_i32 = arith.constant 0 : i32
    %c0_i32_0 = arith.constant 0 : i32
    return %arg0, %c0_i32 : i32, i32
  }
  func.func @transform_1(%arg0: i32) -> (i32, i32) {
    %c0_i32 = arith.constant 0 : i32
    %c0_i32_0 = arith.constant 0 : i32
    %c0_i32_1 = arith.constant 0 : i32
    return %c0_i32, %c0_i32_0 : i32, i32
  }
  func.func @transform_2(%arg0: i32) -> (i32, i32) {
    %c0_i32 = arith.constant 0 : i32
    %c0_i32_0 = arith.constant 0 : i32
    %c0_i32_1 = arith.constant 0 : i32
    return %c0_i32, %c0_i32_0 : i32, i32
  }
  func.func @transform_3(%arg0: i32) -> (i32, i32) {
    %c0_i32 = arith.constant 0 : i32
    %c0_i32_0 = arith.constant 0 : i32
    %c0_i32_1 = arith.constant 0 : i32
    return %c0_i32, %c0_i32_0 : i32, i32
  }
  func.func @transform_4(%arg0: i32) -> (i32, i32) {
    %c0_i32 = arith.constant 0 : i32
    %c0_i32_0 = arith.constant 0 : i32
    %c0_i32_1 = arith.constant 0 : i32
    return %c0_i32, %c0_i32_0 : i32, i32
  }
  func.func @transform_5(%arg0: i32) -> (i32, i32) {
    %c0_i32 = arith.constant 0 : i32
    %c0_i32_0 = arith.constant 0 : i32
    %c0_i32_1 = arith.constant 0 : i32
    return %c0_i32, %c0_i32_0 : i32, i32
  }
  func.func @transform_6(%arg0: i32) -> (i32, i32) {
    %c0_i32 = arith.constant 0 : i32
    %c0_i32_0 = arith.constant 0 : i32
    %c0_i32_1 = arith.constant 0 : i32
    return %c0_i32, %c0_i32_0 : i32, i32
  }
  func.func @transform_7(%arg0: i32) -> (i32, i32) {
    %c0_i32 = arith.constant 0 : i32
    %c0_i32_0 = arith.constant 0 : i32
    %c0_i32_1 = arith.constant 0 : i32
    return %c0_i32, %c0_i32_0 : i32, i32
  }
  func.func @transform_8(%arg0: i32) -> (i32, i32) {
    %c0_i32 = arith.constant 0 : i32
    %c0_i32_0 = arith.constant 0 : i32
    %c0_i32_1 = arith.constant 0 : i32
    return %c0_i32, %c0_i32_0 : i32, i32
  }
  func.func @transform_9(%arg0: i32) -> (i32, i32) {
    %c0_i32 = arith.constant 0 : i32
    %c0_i32_0 = arith.constant 0 : i32
    %c0_i32_1 = arith.constant 0 : i32
    return %c0_i32, %c0_i32_0 : i32, i32
  }
  func.func @transform_10(%arg0: i32) -> (i32, i32) {
    %c0_i32 = arith.constant 0 : i32
    %c0_i32_0 = arith.constant 0 : i32
    %c0_i32_1 = arith.constant 0 : i32
    return %c0_i32, %c0_i32_0 : i32, i32
  }
  func.func @transform_11(%arg0: i32) -> (i32, i32) {
    %c0_i32 = arith.constant 0 : i32
    %c0_i32_0 = arith.constant 0 : i32
    %c0_i32_1 = arith.constant 0 : i32
    return %c0_i32, %c0_i32_0 : i32, i32
  }
  func.func @transform_12(%arg0: i32) -> (i32, i32) {
    %c0_i32 = arith.constant 0 : i32
    %c0_i32_0 = arith.constant 0 : i32
    %c0_i32_1 = arith.constant 0 : i32
    return %c0_i32, %c0_i32_0 : i32, i32
  }
  func.func @transform_13(%arg0: i32) -> (i32, i32) {
    %c0_i32 = arith.constant 0 : i32
    %c0_i32_0 = arith.constant 0 : i32
    %c0_i32_1 = arith.constant 0 : i32
    return %c0_i32, %c0_i32_0 : i32, i32
  }
  func.func @transform_14(%arg0: i32) -> (i32, i32) {
    %c0_i32 = arith.constant 0 : i32
    %c0_i32_0 = arith.constant 0 : i32
    %c0_i32_1 = arith.constant 0 : i32
    return %c0_i32, %c0_i32_0 : i32, i32
  }
  func.func @transform_15(%arg0: i32) -> (i32, i32) {
    %c0_i32 = arith.constant 0 : i32
    %c0_i32_0 = arith.constant 0 : i32
    %c0_i32_1 = arith.constant 0 : i32
    return %c0_i32, %c0_i32_0 : i32, i32
  }
  func.func @transform_16(%arg0: i32) -> (i32, i32) {
    %c0_i32 = arith.constant 0 : i32
    %c0_i32_0 = arith.constant 0 : i32
    %c0_i32_1 = arith.constant 0 : i32
    return %c0_i32, %c0_i32_0 : i32, i32
  }
  func.func @transform_17(%arg0: i32) -> (i32, i32) {
    %c0_i32 = arith.constant 0 : i32
    %c0_i32_0 = arith.constant 0 : i32
    %c0_i32_1 = arith.constant 0 : i32
    return %c0_i32, %c0_i32_0 : i32, i32
  }
  func.func @transform_18(%arg0: i32) -> (i32, i32) {
    %c0_i32 = arith.constant 0 : i32
    %c0_i32_0 = arith.constant 0 : i32
    %c0_i32_1 = arith.constant 0 : i32
    return %c0_i32, %c0_i32_0 : i32, i32
  }
  func.func @transform_19(%arg0: i32) -> (i32, i32) {
    %c0_i32 = arith.constant 0 : i32
    %c0_i32_0 = arith.constant 0 : i32
    %c0_i32_1 = arith.constant 0 : i32
    return %c0_i32, %c0_i32_0 : i32, i32
  }
  func.func @transform_20(%arg0: i32) -> (i32, i32) {
    %c0_i32 = arith.constant 0 : i32
    %c0_i32_0 = arith.constant 0 : i32
    %c0_i32_1 = arith.constant 0 : i32
    return %c0_i32, %c0_i32_0 : i32, i32
  }
  func.func @transform_21(%arg0: i32) -> (i32, i32) {
    %c0_i32 = arith.constant 0 : i32
    %c0_i32_0 = arith.constant 0 : i32
    return %arg0, %c0_i32 : i32, i32
  }
}

</mosaic_0001>

<llo_original>
// kernel: sparse_autoencoder_forward.1
$region0: #{sparse_autoencoder_forward.1}
  #allocation0 [shape = 'u32[]', space=smem, size = 0x4, offset = 0x4, fixed_abs, tag = 'smem constant byte address 0x4 - core index']
  #allocation1 [shape = 'u32[72,128]{1,0:T(1,128)}', space=vmem, size = 0x9000, scoped, tag = 'internal scratch']
  %s0 = inlined_call_operand.vmem [shape: f32[16,784], index: 0, kind: input, shape index: {}]
  %s1 = inlined_call_operand.vmem [shape: bf16[784,256], index: 1, kind: input, shape index: {}]
  %s2 = inlined_call_operand.vmem [shape: f32[1,256], index: 2, kind: input, shape index: {}]
  %s3 = inlined_call_operand.vmem [shape: bf16[256,128], index: 3, kind: input, shape index: {}]
  %s4 = inlined_call_operand.vmem [shape: f32[1,128], index: 4, kind: input, shape index: {}]
  %s5 = inlined_call_operand.vmem [shape: bf16[128,64], index: 5, kind: input, shape index: {}]
  %s6 = inlined_call_operand.vmem [shape: f32[1,64], index: 6, kind: input, shape index: {}]
  %s7 = inlined_call_operand.vmem [shape: bf16[64,32], index: 7, kind: input, shape index: {}]
  %s8 = inlined_call_operand.vmem [shape: f32[1,32], index: 8, kind: input, shape index: {}]
  %s9 = inlined_call_operand.vmem [shape: bf16[32,16], index: 9, kind: input, shape index: {}]
  %s10 = inlined_call_operand.vmem [shape: f32[1,16], index: 10, kind: input, shape index: {}]
  %s11 = inlined_call_operand.vmem [shape: bf16[16,32], index: 11, kind: input, shape index: {}]
  %s12 = inlined_call_operand.vmem [shape: f32[1,32], index: 12, kind: input, shape index: {}]
  %s13 = inlined_call_operand.vmem [shape: bf16[32,64], index: 13, kind: input, shape index: {}]
  %s14 = inlined_call_operand.vmem [shape: f32[1,64], index: 14, kind: input, shape index: {}]
  %s15 = inlined_call_operand.vmem [shape: bf16[64,128], index: 15, kind: input, shape index: {}]
  %s16 = inlined_call_operand.vmem [shape: f32[1,128], index: 16, kind: input, shape index: {}]
  %s17 = inlined_call_operand.vmem [shape: bf16[128,256], index: 17, kind: input, shape index: {}]
  %s18 = inlined_call_operand.vmem [shape: f32[1,256], index: 18, kind: input, shape index: {}]
  %s19 = inlined_call_operand.vmem [shape: bf16[256,784], index: 19, kind: input, shape index: {}]
  %s20 = inlined_call_operand.vmem [shape: f32[1,784], index: 20, kind: input, shape index: {}]
  %s21 = inlined_call_operand.vmem [shape: f32[16,784], index: 21, kind: output, shape index: {}]
  %s22 = sld [smem:[#allocation0]]
  $region94: #{sparse_autoencoder_forward.1} parent=0
    _
  %s24 = ssub.s32 1, %s22
  %s25 = scalar_select 0, %s24, %s22
  // Predicated region
  $region2: #{sparse_autoencoder_forward.1} parent=0 // pred_check
    _
  $region3: #{sparse_autoencoder_forward.1} parent=0 // pred_check_branch
    %27 = sbr.rel (0) target = $region5
  $region4: #{sparse_autoencoder_forward.1} parent=0 // pred_region
    _
  $region5: #{sparse_autoencoder_forward.1} parent=0 // pred_fallthru
    _
  // Predicated region
  $region6: #{sparse_autoencoder_forward.1} parent=0 // pred_check
    _
  $region7: #{sparse_autoencoder_forward.1} parent=0 // pred_check_branch
    %29 = sbr.rel (0) target = $region9
  $region8: #{sparse_autoencoder_forward.1} parent=0 // pred_region
    _
  $region9: #{sparse_autoencoder_forward.1} parent=0 // pred_fallthru
    _
  // Predicated region
  $region10: #{sparse_autoencoder_forward.1} parent=0 // pred_check
    _
  $region11: #{sparse_autoencoder_forward.1} parent=0 // pred_check_branch
    %31 = sbr.rel (0) target = $region13
  $region12: #{sparse_autoencoder_forward.1} parent=0 // pred_region
    _
  $region13: #{sparse_autoencoder_forward.1} parent=0 // pred_fallthru
    _
  // Predicated region
  $region14: #{sparse_autoencoder_forward.1} parent=0 // pred_check
    _
  $region15: #{sparse_autoencoder_forward.1} parent=0 // pred_check_branch
    %33 = sbr.rel (0) target = $region17
  $region16: #{sparse_autoencoder_forward.1} parent=0 // pred_region
    _
  $region17: #{sparse_autoencoder_forward.1} parent=0 // pred_fallthru
    _
  // Predicated region
  $region18: #{sparse_autoencoder_forward.1} parent=0 // pred_check
    _
  $region19: #{sparse_autoencoder_forward.1} parent=0 // pred_check_branch
    %35 = sbr.rel (0) target = $region21
  $region20: #{sparse_autoencoder_forward.1} parent=0 // pred_region
    _
  $region21: #{sparse_autoencoder_forward.1} parent=0 // pred_fallthru
    _
  // Predicated region
  $region22: #{sparse_autoencoder_forward.1} parent=0 // pred_check
    _
  $region23: #{sparse_autoencoder_forward.1} parent=0 // pred_check_branch
    %37 = sbr.rel (0) target = $region25
  $region24: #{sparse_autoencoder_forward.1} parent=0 // pred_region
    _
  $region25: #{sparse_autoencoder_forward.1} parent=0 // pred_fallthru
    _
  // Predicated region
  $region26: #{sparse_autoencoder_forward.1} parent=0 // pred_check
    _
  $region27: #{sparse_autoencoder_forward.1} parent=0 // pred_check_branch
    %39 = sbr.rel (0) target = $region29
  $region28: #{sparse_autoencoder_forward.1} parent=0 // pred_region
    _
  $region29: #{sparse_autoencoder_forward.1} parent=0 // pred_fallthru
    _
  // Predicated region
  $region30: #{sparse_autoencoder_forward.1} parent=0 // pred_check
    _
  $region31: #{sparse_autoencoder_forward.1} parent=0 // pred_check_branch
    %41 = sbr.rel (0) target = $region33
  $region32: #{sparse_autoencoder_forward.1} parent=0 // pred_region
    _
  $region33: #{sparse_autoencoder_forward.1} parent=0 // pred_fallthru
    _
  // Predicated region
  $region34: #{sparse_autoencoder_forward.1} parent=0 // pred_check
    _
  $region35: #{sparse_autoencoder_forward.1} parent=0 // pred_check_branch
    %43 = sbr.rel (0) target = $region37
  $region36: #{sparse_autoencoder_forward.1} parent=0 // pred_region
    _
  $region37: #{sparse_autoencoder_forward.1} parent=0 // pred_fallthru
    _
  // Predicated region
  $region38: #{sparse_autoencoder_forward.1} parent=0 // pred_check
    _
  $region39: #{sparse_autoencoder_forward.1} parent=0 // pred_check_branch
    %45 = sbr.rel (0) target = $region41
  $region40: #{sparse_autoencoder_forward.1} parent=0 // pred_region
    _
  $region41: #{sparse_autoencoder_forward.1} parent=0 // pred_fallthru
    _
  // Predicated region
  $region42: #{sparse_autoencoder_forward.1} parent=0 // pred_check
    _
  $region43: #{sparse_autoencoder_forward.1} parent=0 // pred_check_branch
    %47 = sbr.rel (0) target = $region45
  $region44: #{sparse_autoencoder_forward.1} parent=0 // pred_region
    _
  $region45: #{sparse_autoencoder_forward.1} parent=0 // pred_fallthru
    _
  // Predicated region
  $region46: #{sparse_autoencoder_forward.1} parent=0 // pred_check
    _
  $region47: #{sparse_autoencoder_forward.1} parent=0 // pred_check_branch
    %49 = sbr.rel (0) target = $region49
  $region48: #{sparse_autoencoder_forward.1} parent=0 // pred_region
    _
  $region49: #{sparse_autoencoder_forward.1} parent=0 // pred_fallthru
    _
  // Predicated region
  $region50: #{sparse_autoencoder_forward.1} parent=0 // pred_check
    _
  $region51: #{sparse_autoencoder_forward.1} parent=0 // pred_check_branch
    %51 = sbr.rel (0) target = $region53
  $region52: #{sparse_autoencoder_forward.1} parent=0 // pred_region
    _
  $region53: #{sparse_autoencoder_forward.1} parent=0 // pred_fallthru
    _
  // Predicated region
  $region54: #{sparse_autoencoder_forward.1} parent=0 // pred_check
    _
  $region55: #{sparse_autoencoder_forward.1} parent=0 // pred_check_branch
    %53 = sbr.rel (0) target = $region57
  $region56: #{sparse_autoencoder_forward.1} parent=0 // pred_region
    _
  $region57: #{sparse_autoencoder_forward.1} parent=0 // pred_fallthru
    _
  // Predicated region
  $region58: #{sparse_autoencoder_forward.1} parent=0 // pred_check
    _
  $region59: #{sparse_autoencoder_forward.1} parent=0 // pred_check_branch
    %55 = sbr.rel (0) target = $region61
  $region60: #{sparse_autoencoder_forward.1} parent=0 // pred_region
    _
  $region61: #{sparse_autoencoder_forward.1} parent=0 // pred_fallthru
    _
  // Predicated region
  $region62: #{sparse_autoencoder_forward.1} parent=0 // pred_check
    _
  $region63: #{sparse_autoencoder_forward.1} parent=0 // pred_check_branch
    %57 = sbr.rel (0) target = $region65
  $region64: #{sparse_autoencoder_forward.1} parent=0 // pred_region
    _
  $region65: #{sparse_autoencoder_forward.1} parent=0 // pred_fallthru
    _
  // Predicated region
  $region66: #{sparse_autoencoder_forward.1} parent=0 // pred_check
    _
  $region67: #{sparse_autoencoder_forward.1} parent=0 // pred_check_branch
    %59 = sbr.rel (0) target = $region69
  $region68: #{sparse_autoencoder_forward.1} parent=0 // pred_region
    _
  $region69: #{sparse_autoencoder_forward.1} parent=0 // pred_fallthru
    _
  // Predicated region
  $region70: #{sparse_autoencoder_forward.1} parent=0 // pred_check
    _
  $region71: #{sparse_autoencoder_forward.1} parent=0 // pred_check_branch
    %61 = sbr.rel (0) target = $region73
  $region72: #{sparse_autoencoder_forward.1} parent=0 // pred_region
    _
  $region73: #{sparse_autoencoder_forward.1} parent=0 // pred_fallthru
    _
  // Predicated region
  $region74: #{sparse_autoencoder_forward.1} parent=0 // pred_check
    _
  $region75: #{sparse_autoencoder_forward.1} parent=0 // pred_check_branch
    %63 = sbr.rel (0) target = $region77
  $region76: #{sparse_autoencoder_forward.1} parent=0 // pred_region
    _
  $region77: #{sparse_autoencoder_forward.1} parent=0 // pred_fallthru
    _
  // Predicated region
  $region78: #{sparse_autoencoder_forward.1} parent=0 // pred_check
    _
  $region79: #{sparse_autoencoder_forward.1} parent=0 // pred_check_branch
    %65 = sbr.rel (0) target = $region81
  $region80: #{sparse_autoencoder_forward.1} parent=0 // pred_region
    _
  $region81: #{sparse_autoencoder_forward.1} parent=0 // pred_fallthru
    _
  // Predicated region
  $region82: #{sparse_autoencoder_forward.1} parent=0 // pred_check
    _
  $region83: #{sparse_autoencoder_forward.1} parent=0 // pred_check_branch
    %67 = sbr.rel (0) target = $region85
  $region84: #{sparse_autoencoder_forward.1} parent=0 // pred_region
    _
  $region85: #{sparse_autoencoder_forward.1} parent=0 // pred_fallthru
    _
  %v69 = vld [vmem:[%s0] sm:$0xff]
  %v70 = vld [vmem:[%s0 + $0x8] sm:$0xff]
  %v71 = vld [vmem:[%s0 + $0x10] sm:$0xff]
  %v72 = vld [vmem:[%s0 + $0x18] sm:$0xff]
  %v73 = vld [vmem:[%s0 + $0x20] sm:$0xff]
  %v74 = vld [vmem:[%s0 + $0x28] sm:$0xff]
  %v75 = vld [vmem:[%s0 + $0x30] sm:$0xff]
  %v76 = vld [vmem:[%s0 + $0x38] sm:$0xff]
  %v77 = vld [vmem:[%s0 + $0x40] sm:$0xff]
  %v78 = vld [vmem:[%s0 + $0x48] sm:$0xff]
  %v79 = vld [vmem:[%s0 + $0x50] sm:$0xff]
  %v80 = vld [vmem:[%s0 + $0x58] sm:$0xff]
  %v81 = vld [vmem:[%s0 + $0x60] sm:$0xff]
  %v82 = vld [vmem:[%s0 + $0x68] sm:$0xff]
  %v83 = vpack.c.bf16 %v76, %v69
  %v84 = vpack.c.bf16 %v77, %v70
  %v85 = vpack.c.bf16 %v78, %v71
  %v86 = vpack.c.bf16 %v79, %v72
  %v87 = vpack.c.bf16 %v80, %v73
  %v88 = vpack.c.bf16 %v81, %v74
  %v89 = vpack.c.bf16 %v82, %v75
  %v90 = vld [vmem:[%s1] sm:$0xff]
  %v91 = vld [vmem:[%s1 + $0x8] sm:$0xff]
  %v92 = vld [vmem:[%s1 + $0x10] sm:$0xff]
  %v93 = vld [vmem:[%s1 + $0x18] sm:$0xff]
  %v94 = vld [vmem:[%s1 + $0x20] sm:$0xff]
  %v95 = vld [vmem:[%s1 + $0x28] sm:$0xff]
  %v96 = vld [vmem:[%s1 + $0x30] sm:$0xff]
  %v97 = vld [vmem:[%s1 + $0x38] sm:$0xff]
  %v98 = vld [vmem:[%s1 + $0x40] sm:$0xff]
  %v99 = vld [vmem:[%s1 + $0x48] sm:$0xff]
  %v100 = vld [vmem:[%s1 + $0x50] sm:$0xff]
  %v101 = vld [vmem:[%s1 + $0x58] sm:$0xff]
  %v102 = vld [vmem:[%s1 + $0x60] sm:$0xff]
  %v103 = vld [vmem:[%s1 + $0x68] sm:$0xff]
  %v104 = vld [vmem:[%s1 + $0x70] sm:$0xff]
  %v105 = vld [vmem:[%s1 + $0x78] sm:$0xff]
  %v106 = vld [vmem:[%s1 + $0x80] sm:$0xff]
  %v107 = vld [vmem:[%s1 + $0x88] sm:$0xff]
  %v108 = vld [vmem:[%s1 + $0x90] sm:$0xff]
  %v109 = vld [vmem:[%s1 + $0x98] sm:$0xff]
  %v110 = vld [vmem:[%s1 + $0xa0] sm:$0xff]
  %v111 = vld [vmem:[%s1 + $0xa8] sm:$0xff]
  %v112 = vld [vmem:[%s1 + $0xb0] sm:$0xff]
  %v113 = vld [vmem:[%s1 + $0xb8] sm:$0xff]
  %v114 = vld [vmem:[%s1 + $0xc0] sm:$0xff]
  %v115 = vld [vmem:[%s1 + $0xc8] sm:$0xff]
  %v116 = vld [vmem:[%s1 + $0xd0] sm:$0xff]
  %v117 = vld [vmem:[%s1 + $0xd8] sm:$0xff]
  %v118 = vld [vmem:[%s1 + $0xe0] sm:$0xff]
  %v119 = vld [vmem:[%s1 + $0xe8] sm:$0xff]
  %v120 = vld [vmem:[%s1 + $0xf0] sm:$0xff]
  %v121 = vld [vmem:[%s1 + $0xf8] sm:$0xff]
  %v122 = vld [vmem:[%s1 + $0x100] sm:$0xff]
  %v123 = vld [vmem:[%s1 + $0x108] sm:$0xff]
  %v124 = vld [vmem:[%s1 + $0x110] sm:$0xff]
  %v125 = vld [vmem:[%s1 + $0x118] sm:$0xff]
  %v126 = vld [vmem:[%s1 + $0x120] sm:$0xff]
  %v127 = vld [vmem:[%s1 + $0x128] sm:$0xff]
  %v128 = vld [vmem:[%s1 + $0x130] sm:$0xff]
  %v129 = vld [vmem:[%s1 + $0x138] sm:$0xff]
  %v130 = vld [vmem:[%s1 + $0x140] sm:$0xff]
  %v131 = vld [vmem:[%s1 + $0x148] sm:$0xff]
  %v132 = vld [vmem:[%s1 + $0x150] sm:$0xff]
  %v133 = vld [vmem:[%s1 + $0x158] sm:$0xff]
  %v134 = vld [vmem:[%s1 + $0x160] sm:$0xff]
  %v135 = vld [vmem:[%s1 + $0x168] sm:$0xff]
  %v136 = vld [vmem:[%s1 + $0x170] sm:$0xff]
  %v137 = vld [vmem:[%s1 + $0x178] sm:$0xff]
  %v138 = vld [vmem:[%s1 + $0x180] sm:$0xff]
  %v139 = vld [vmem:[%s1 + $0x188] sm:$0xff]
  %v140 = vld [vmem:[%s1 + $0x190] sm:$0xff]
  %v141 = vld [vmem:[%s1 + $0x198] sm:$0xff]
  %v142 = vld [vmem:[%s1 + $0x1a0] sm:$0xff]
  %v143 = vld [vmem:[%s1 + $0x1a8] sm:$0xff]
  %v144 = vld [vmem:[%s1 + $0x1b0] sm:$0xff]
  %v145 = vld [vmem:[%s1 + $0x1b8] sm:$0xff]
  %v146 = vld [vmem:[%s1 + $0x1c0] sm:$0xff]
  %v147 = vld [vmem:[%s1 + $0x1c8] sm:$0xff]
  %v148 = vld [vmem:[%s1 + $0x1d0] sm:$0xff]
  %v149 = vld [vmem:[%s1 + $0x1d8] sm:$0xff]
  %v150 = vld [vmem:[%s1 + $0x1e0] sm:$0xff]
  %v151 = vld [vmem:[%s1 + $0x1e8] sm:$0xff]
  %v152 = vld [vmem:[%s1 + $0x1f0] sm:$0xff]
  %v153 = vld [vmem:[%s1 + $0x1f8] sm:$0xff]
  %v154 = vld [vmem:[%s1 + $0x200] sm:$0xff]
  %v155 = vld [vmem:[%s1 + $0x208] sm:$0xff]
  %v156 = vld [vmem:[%s1 + $0x210] sm:$0xff]
  %v157 = vld [vmem:[%s1 + $0x218] sm:$0xff]
  %v158 = vld [vmem:[%s1 + $0x220] sm:$0xff]
  %v159 = vld [vmem:[%s1 + $0x228] sm:$0xff]
  %v160 = vld [vmem:[%s1 + $0x230] sm:$0xff]
  %v161 = vld [vmem:[%s1 + $0x238] sm:$0xff]
  %v162 = vld [vmem:[%s1 + $0x240] sm:$0xff]
  %v163 = vld [vmem:[%s1 + $0x248] sm:$0xff]
  %v164 = vld [vmem:[%s1 + $0x250] sm:$0xff]
  %v165 = vld [vmem:[%s1 + $0x258] sm:$0xff]
  %v166 = vld [vmem:[%s1 + $0x260] sm:$0xff]
  %v167 = vld [vmem:[%s1 + $0x268] sm:$0xff]
  %v168 = vld [vmem:[%s1 + $0x270] sm:$0xff]
  %v169 = vld [vmem:[%s1 + $0x278] sm:$0xff]
  %v170 = vld [vmem:[%s1 + $0x280] sm:$0xff]
  %v171 = vld [vmem:[%s1 + $0x288] sm:$0xff]
  %v172 = vld [vmem:[%s1 + $0x290] sm:$0xff]
  %v173 = vld [vmem:[%s1 + $0x298] sm:$0xff]
  %v174 = vld [vmem:[%s1 + $0x2a0] sm:$0xff]
  %v175 = vld [vmem:[%s1 + $0x2a8] sm:$0xff]
  %v176 = vld [vmem:[%s1 + $0x2b0] sm:$0xff]
  %v177 = vld [vmem:[%s1 + $0x2b8] sm:$0xff]
  %v178 = vld [vmem:[%s1 + $0x2c0] sm:$0xff]
  %v179 = vld [vmem:[%s1 + $0x2c8] sm:$0xff]
  %v180 = vld [vmem:[%s1 + $0x2d0] sm:$0xff]
  %v181 = vld [vmem:[%s1 + $0x2d8] sm:$0xff]
  %v182 = vld [vmem:[%s1 + $0x2e0] sm:$0xff]
  %v183 = vld [vmem:[%s1 + $0x2e8] sm:$0xff]
  %v184 = vld [vmem:[%s1 + $0x2f0] sm:$0xff]
  %v185 = vld [vmem:[%s1 + $0x2f8] sm:$0xff]
  %v186 = vld [vmem:[%s1 + $0x300] sm:$0xff]
  %v187 = vld [vmem:[%s1 + $0x308] sm:$0xff]
  %v188 = vld [vmem:[%s2] sm:$0x3]
  %v190 = vperm.slane %v188, 0
  %v191 = vperm.slane %v188, 1
  %v292 = vunpack.c.l.b16 %v90
  %v293 = vunpack.c.h.b16 %v90
  %v294 = vunpack.c.l.b16 %v91
  %v295 = vunpack.c.h.b16 %v91
  %v296 = vunpack.c.l.b16 %v92
  %v297 = vunpack.c.h.b16 %v92
  %v298 = vunpack.c.l.b16 %v93
  %v299 = vunpack.c.h.b16 %v93
  %v300 = vunpack.c.l.b16 %v94
  %v301 = vunpack.c.h.b16 %v94
  %v302 = vunpack.c.l.b16 %v95
  %v303 = vunpack.c.h.b16 %v95
  %v304 = vunpack.c.l.b16 %v96
  %v305 = vunpack.c.h.b16 %v96
  %v306 = vunpack.c.l.b16 %v97
  %v307 = vunpack.c.h.b16 %v97
  %v308 = vunpack.c.l.b16 %v98
  %v309 = vunpack.c.h.b16 %v98
  %v310 = vunpack.c.l.b16 %v99
  %v311 = vunpack.c.h.b16 %v99
  %v312 = vunpack.c.l.b16 %v100
  %v313 = vunpack.c.h.b16 %v100
  %v314 = vunpack.c.l.b16 %v101
  %v315 = vunpack.c.h.b16 %v101
  %v316 = vunpack.c.l.b16 %v102
  %v317 = vunpack.c.h.b16 %v102
  %v318 = vunpack.c.l.b16 %v103
  %v319 = vunpack.c.h.b16 %v103
  %v320 = vunpack.c.l.b16 %v104
  %v321 = vunpack.c.h.b16 %v104
  %v322 = vunpack.c.l.b16 %v105
  %v323 = vunpack.c.h.b16 %v105
  %v324 = vunpack.c.l.b16 %v106
  %v325 = vunpack.c.h.b16 %v106
  %v326 = vunpack.c.l.b16 %v107
  %v327 = vunpack.c.h.b16 %v107
  %v328 = vunpack.c.l.b16 %v108
  %v329 = vunpack.c.h.b16 %v108
  %v330 = vunpack.c.l.b16 %v109
  %v331 = vunpack.c.h.b16 %v109
  %v332 = vunpack.c.l.b16 %v110
  %v333 = vunpack.c.h.b16 %v110
  %v334 = vunpack.c.l.b16 %v111
  %v335 = vunpack.c.h.b16 %v111
  %v336 = vunpack.c.l.b16 %v112
  %v337 = vunpack.c.h.b16 %v112
  %v338 = vunpack.c.l.b16 %v113
  %v339 = vunpack.c.h.b16 %v113
  %v340 = vunpack.c.l.b16 %v114
  %v341 = vunpack.c.h.b16 %v114
  %v342 = vunpack.c.l.b16 %v115
  %v343 = vunpack.c.h.b16 %v115
  %v344 = vunpack.c.l.b16 %v116
  %v345 = vunpack.c.h.b16 %v116
  %v346 = vunpack.c.l.b16 %v117
  %v347 = vunpack.c.h.b16 %v117
  %v348 = vunpack.c.l.b16 %v118
  %v349 = vunpack.c.h.b16 %v118
  %v350 = vunpack.c.l.b16 %v119
  %v351 = vunpack.c.h.b16 %v119
  %v352 = vunpack.c.l.b16 %v120
  %v353 = vunpack.c.h.b16 %v120
  %v354 = vunpack.c.l.b16 %v121
  %v355 = vunpack.c.h.b16 %v121
  %v356 = vunpack.c.l.b16 %v122
  %v357 = vunpack.c.h.b16 %v122
  %v358 = vunpack.c.l.b16 %v123
  %v359 = vunpack.c.h.b16 %v123
  %v360 = vunpack.c.l.b16 %v124
  %v361 = vunpack.c.h.b16 %v124
  %v362 = vunpack.c.l.b16 %v125
  %v363 = vunpack.c.h.b16 %v125
  %v364 = vunpack.c.l.b16 %v126
  %v365 = vunpack.c.h.b16 %v126
  %v366 = vunpack.c.l.b16 %v127
  %v367 = vunpack.c.h.b16 %v127
  %v368 = vunpack.c.l.b16 %v128
  %v369 = vunpack.c.h.b16 %v128
  %v370 = vunpack.c.l.b16 %v129
  %v371 = vunpack.c.h.b16 %v129
  %v372 = vunpack.c.l.b16 %v130
  %v373 = vunpack.c.h.b16 %v130
  %v374 = vunpack.c.l.b16 %v131
  %v375 = vunpack.c.h.b16 %v131
  %v376 = vunpack.c.l.b16 %v132
  %v377 = vunpack.c.h.b16 %v132
  %v378 = vunpack.c.l.b16 %v133
  %v379 = vunpack.c.h.b16 %v133
  %v380 = vunpack.c.l.b16 %v134
  %v381 = vunpack.c.h.b16 %v134
  %v382 = vunpack.c.l.b16 %v135
  %v383 = vunpack.c.h.b16 %v135
  %v384 = vunpack.c.l.b16 %v136
  %v385 = vunpack.c.h.b16 %v136
  %v386 = vunpack.c.l.b16 %v137
  %v387 = vunpack.c.h.b16 %v137
  %v388 = vunpack.c.l.b16 %v138
  %v389 = vunpack.c.h.b16 %v138
  %v390 = vunpack.c.l.b16 %v139
  %v391 = vunpack.c.h.b16 %v139
  %v392 = vunpack.c.l.b16 %v140
  %v393 = vunpack.c.h.b16 %v140
  %v394 = vunpack.c.l.b16 %v141
  %v395 = vunpack.c.h.b16 %v141
  %v396 = vunpack.c.l.b16 %v142
  %v397 = vunpack.c.h.b16 %v142
  %v398 = vunpack.c.l.b16 %v143
  %v399 = vunpack.c.h.b16 %v143
  %v400 = vunpack.c.l.b16 %v144
  %v401 = vunpack.c.h.b16 %v144
  %v402 = vunpack.c.l.b16 %v145
  %v403 = vunpack.c.h.b16 %v145
  %v404 = vunpack.c.l.b16 %v146
  %v405 = vunpack.c.h.b16 %v146
  %v406 = vunpack.c.l.b16 %v147
  %v407 = vunpack.c.h.b16 %v147
  %v408 = vunpack.c.l.b16 %v148
  %v409 = vunpack.c.h.b16 %v148
  %v410 = vunpack.c.l.b16 %v149
  %v411 = vunpack.c.h.b16 %v149
  %v412 = vunpack.c.l.b16 %v150
  %v413 = vunpack.c.h.b16 %v150
  %v414 = vunpack.c.l.b16 %v151
  %v415 = vunpack.c.h.b16 %v151
  %v416 = vunpack.c.l.b16 %v152
  %v417 = vunpack.c.h.b16 %v152
  %v418 = vunpack.c.l.b16 %v153
  %v419 = vunpack.c.h.b16 %v153
  %v420 = vunpack.c.l.b16 %v154
  %v421 = vunpack.c.h.b16 %v154
  %v422 = vunpack.c.l.b16 %v155
  %v423 = vunpack.c.h.b16 %v155
  %v424 = vunpack.c.l.b16 %v156
  %v425 = vunpack.c.h.b16 %v156
  %v426 = vunpack.c.l.b16 %v157
  %v427 = vunpack.c.h.b16 %v157
  %v428 = vunpack.c.l.b16 %v158
  %v429 = vunpack.c.h.b16 %v158
  %v430 = vunpack.c.l.b16 %v159
  %v431 = vunpack.c.h.b16 %v159
  %v432 = vunpack.c.l.b16 %v160
  %v433 = vunpack.c.h.b16 %v160
  %v434 = vunpack.c.l.b16 %v161
  %v435 = vunpack.c.h.b16 %v161
  %v436 = vunpack.c.l.b16 %v162
  %v437 = vunpack.c.h.b16 %v162
  %v438 = vunpack.c.l.b16 %v163
  %v439 = vunpack.c.h.b16 %v163
  %v440 = vunpack.c.l.b16 %v164
  %v441 = vunpack.c.h.b16 %v164
  %v442 = vunpack.c.l.b16 %v165
  %v443 = vunpack.c.h.b16 %v165
  %v444 = vunpack.c.l.b16 %v166
  %v445 = vunpack.c.h.b16 %v166
  %v446 = vunpack.c.l.b16 %v167
  %v447 = vunpack.c.h.b16 %v167
  %v448 = vunpack.c.l.b16 %v168
  %v449 = vunpack.c.h.b16 %v168
  %v450 = vunpack.c.l.b16 %v169
  %v451 = vunpack.c.h.b16 %v169
  %v452 = vunpack.c.l.b16 %v170
  %v453 = vunpack.c.h.b16 %v170
  %v454 = vunpack.c.l.b16 %v171
  %v455 = vunpack.c.h.b16 %v171
  %v456 = vunpack.c.l.b16 %v172
  %v457 = vunpack.c.h.b16 %v172
  %v458 = vunpack.c.l.b16 %v173
  %v459 = vunpack.c.h.b16 %v173
  %v460 = vunpack.c.l.b16 %v174
  %v461 = vunpack.c.h.b16 %v174
  %v462 = vunpack.c.l.b16 %v175
  %v463 = vunpack.c.h.b16 %v175
  %v464 = vunpack.c.l.b16 %v176
  %v465 = vunpack.c.h.b16 %v176
  %v466 = vunpack.c.l.b16 %v177
  %v467 = vunpack.c.h.b16 %v177
  %v468 = vunpack.c.l.b16 %v178
  %v469 = vunpack.c.h.b16 %v178
  %v470 = vunpack.c.l.b16 %v179
  %v471 = vunpack.c.h.b16 %v179
  %v472 = vunpack.c.l.b16 %v180
  %v473 = vunpack.c.h.b16 %v180
  %v474 = vunpack.c.l.b16 %v181
  %v475 = vunpack.c.h.b16 %v181
  %v476 = vunpack.c.l.b16 %v182
  %v477 = vunpack.c.h.b16 %v182
  %v478 = vunpack.c.l.b16 %v183
  %v479 = vunpack.c.h.b16 %v183
  %v480 = vunpack.c.l.b16 %v184
  %v481 = vunpack.c.h.b16 %v184
  %v482 = vunpack.c.l.b16 %v185
  %v483 = vunpack.c.h.b16 %v185
  %v484 = vunpack.c.l.b16 %v186
  %v485 = vunpack.c.h.b16 %v186
  %v486 = vunpack.c.l.b16 %v187
  %v487 = vunpack.c.h.b16 %v187
  %v488 = vpack.c.b16 %v294, %v292
  %v489 = vpack.c.b16 %v295, %v293
  %v490 = vpack.c.b16 %v298, %v296
  %v491 = vpack.c.b16 %v299, %v297
  %v492 = vpack.c.b16 %v302, %v300
  %v493 = vpack.c.b16 %v303, %v301
  %v494 = vpack.c.b16 %v306, %v304
  %v495 = vpack.c.b16 %v307, %v305
  %v496 = vpack.c.b16 %v310, %v308
  %v497 = vpack.c.b16 %v311, %v309
  %v498 = vpack.c.b16 %v314, %v312
  %v499 = vpack.c.b16 %v315, %v313
  %v500 = vpack.c.b16 %v318, %v316
  %v501 = vpack.c.b16 %v319, %v317
  %v502 = vpack.c.b16 %v322, %v320
  %v503 = vpack.c.b16 %v323, %v321
  %v504 = vpack.c.b16 %v326, %v324
  %v505 = vpack.c.b16 %v327, %v325
  %v506 = vpack.c.b16 %v330, %v328
  %v507 = vpack.c.b16 %v331, %v329
  %v508 = vpack.c.b16 %v334, %v332
  %v509 = vpack.c.b16 %v335, %v333
  %v510 = vpack.c.b16 %v338, %v336
  %v511 = vpack.c.b16 %v339, %v337
  %v512 = vpack.c.b16 %v342, %v340
  %v513 = vpack.c.b16 %v343, %v341
  %v514 = vpack.c.b16 %v346, %v344
  %v515 = vpack.c.b16 %v347, %v345
  %v516 = vpack.c.b16 %v350, %v348
  %v517 = vpack.c.b16 %v351, %v349
  %v518 = vpack.c.b16 %v354, %v352
  %v519 = vpack.c.b16 %v355, %v353
  %v520 = vpack.c.b16 %v358, %v356
  %v521 = vpack.c.b16 %v359, %v357
  %v522 = vpack.c.b16 %v362, %v360
  %v523 = vpack.c.b16 %v363, %v361
  %v524 = vpack.c.b16 %v366, %v364
  %v525 = vpack.c.b16 %v367, %v365
  %v526 = vpack.c.b16 %v370, %v368
  %v527 = vpack.c.b16 %v371, %v369
  %v528 = vpack.c.b16 %v374, %v372
  %v529 = vpack.c.b16 %v375, %v373
  %v530 = vpack.c.b16 %v378, %v376
  %v531 = vpack.c.b16 %v379, %v377
  %v532 = vpack.c.b16 %v382, %v380
  %v533 = vpack.c.b16 %v383, %v381
  %v534 = vpack.c.b16 %v386, %v384
  %v535 = vpack.c.b16 %v387, %v385
  %v536 = vpack.c.b16 %v390, %v388
  %v537 = vpack.c.b16 %v391, %v389
  %v538 = vpack.c.b16 %v394, %v392
  %v539 = vpack.c.b16 %v395, %v393
  %v540 = vpack.c.b16 %v398, %v396
  %v541 = vpack.c.b16 %v399, %v397
  %v542 = vpack.c.b16 %v402, %v400
  %v543 = vpack.c.b16 %v403, %v401
  %v544 = vpack.c.b16 %v406, %v404
  %v545 = vpack.c.b16 %v407, %v405
  %v546 = vpack.c.b16 %v410, %v408
  %v547 = vpack.c.b16 %v411, %v409
  %v548 = vpack.c.b16 %v414, %v412
  %v549 = vpack.c.b16 %v415, %v413
  %v550 = vpack.c.b16 %v418, %v416
  %v551 = vpack.c.b16 %v419, %v417
  %v552 = vpack.c.b16 %v422, %v420
  %v553 = vpack.c.b16 %v423, %v421
  %v554 = vpack.c.b16 %v426, %v424
  %v555 = vpack.c.b16 %v427, %v425
  %v556 = vpack.c.b16 %v430, %v428
  %v557 = vpack.c.b16 %v431, %v429
  %v558 = vpack.c.b16 %v434, %v432
  %v559 = vpack.c.b16 %v435, %v433
  %v560 = vpack.c.b16 %v438, %v436
  %v561 = vpack.c.b16 %v439, %v437
  %v562 = vpack.c.b16 %v442, %v440
  %v563 = vpack.c.b16 %v443, %v441
  %v564 = vpack.c.b16 %v446, %v444
  %v565 = vpack.c.b16 %v447, %v445
  %v566 = vpack.c.b16 %v450, %v448
  %v567 = vpack.c.b16 %v451, %v449
  %v568 = vpack.c.b16 %v454, %v452
  %v569 = vpack.c.b16 %v455, %v453
  %v570 = vpack.c.b16 %v458, %v456
  %v571 = vpack.c.b16 %v459, %v457
  %v572 = vpack.c.b16 %v462, %v460
  %v573 = vpack.c.b16 %v463, %v461
  %v574 = vpack.c.b16 %v466, %v464
  %v575 = vpack.c.b16 %v467, %v465
  %v576 = vpack.c.b16 %v470, %v468
  %v577 = vpack.c.b16 %v471, %v469
  %v578 = vpack.c.b16 %v474, %v472
  %v579 = vpack.c.b16 %v475, %v473
  %v580 = vpack.c.b16 %v478, %v476
  %v581 = vpack.c.b16 %v479, %v477
  %v582 = vpack.c.b16 %v482, %v480
  %v583 = vpack.c.b16 %v483, %v481
  %v584 = vpack.c.b16 %v486, %v484
  %v585 = vpack.c.b16 %v487, %v485
  %vm684 = vcmask 130048
  %v686 = vsel %vm684, %v89, 0
  %688 = vmatpush.bf16.msra.mxu0 %v502
  %689 = vmatpush.bf16.msra.mxu0 %v500
  %690 = vmatpush.bf16.msra.mxu0 %v498
  %691 = vmatpush.bf16.msra.mxu0 %v496
  %692 = vmatpush.bf16.msra.mxu0 %v494
  %693 = vmatpush.bf16.msra.mxu0 %v492
  %694 = vmatpush.bf16.msra.mxu0 %v490
  %695 = vmatpush.bf16.msra.mxu0 %v488
  %696 = vmatmul.bf16.gmra.mxu0 %v83
  %v697 = vpop.f32.mrf.mxu0
  %v698 = vadd.f32 %v190, %v697
  %v699 = vpop.f32.mrf.mxu0
  %v700 = vadd.f32 %v190, %v699
  %701 = vdwg.mxu0
  %702 = vmatpush.bf16.msra.mxu0 %v518
  %703 = vmatpush.bf16.msra.mxu0 %v516
  %704 = vmatpush.bf16.msra.mxu0 %v514
  %705 = vmatpush.bf16.msra.mxu0 %v512
  %706 = vmatpush.bf16.msra.mxu0 %v510
  %707 = vmatpush.bf16.msra.mxu0 %v508
  %708 = vmatpush.bf16.msra.mxu0 %v506
  %709 = vmatpush.bf16.msra.mxu0 %v504
  %710 = vmatmul.bf16.gmra.mxu0 %v84
  %v711 = vpop.f32.mrf.mxu0
  %v712 = vadd.f32 %v698, %v711
  %v713 = vpop.f32.mrf.mxu0
  %v714 = vadd.f32 %v700, %v713
  %715 = vdwg.mxu0
  %716 = vmatpush.bf16.msra.mxu0 %v534
  %717 = vmatpush.bf16.msra.mxu0 %v532
  %718 = vmatpush.bf16.msra.mxu0 %v530
  %719 = vmatpush.bf16.msra.mxu0 %v528
  %720 = vmatpush.bf16.msra.mxu0 %v526
  %721 = vmatpush.bf16.msra.mxu0 %v524
  %722 = vmatpush.bf16.msra.mxu0 %v522
  %723 = vmatpush.bf16.msra.mxu0 %v520
  %724 = vmatmul.bf16.gmra.mxu0 %v85
  %v725 = vpop.f32.mrf.mxu0
  %v726 = vadd.f32 %v712, %v725
  %v727 = vpop.f32.mrf.mxu0
  %v728 = vadd.f32 %v714, %v727
  %729 = vdwg.mxu0
  %730 = vmatpush.bf16.msra.mxu0 %v550
  %731 = vmatpush.bf16.msra.mxu0 %v548
  %732 = vmatpush.bf16.msra.mxu0 %v546
  %733 = vmatpush.bf16.msra.mxu0 %v544
  %734 = vmatpush.bf16.msra.mxu0 %v542
  %735 = vmatpush.bf16.msra.mxu0 %v540
  %736 = vmatpush.bf16.msra.mxu0 %v538
  %737 = vmatpush.bf16.msra.mxu0 %v536
  %738 = vmatmul.bf16.gmra.mxu0 %v86
  %v739 = vpop.f32.mrf.mxu0
  %v740 = vadd.f32 %v726, %v739
  %v741 = vpop.f32.mrf.mxu0
  %v742 = vadd.f32 %v728, %v741
  %743 = vdwg.mxu0
  %744 = vmatpush.bf16.msra.mxu0 %v566
  %745 = vmatpush.bf16.msra.mxu0 %v564
  %746 = vmatpush.bf16.msra.mxu0 %v562
  %747 = vmatpush.bf16.msra.mxu0 %v560
  %748 = vmatpush.bf16.msra.mxu0 %v558
  %749 = vmatpush.bf16.msra.mxu0 %v556
  %750 = vmatpush.bf16.msra.mxu0 %v554
  %751 = vmatpush.bf16.msra.mxu0 %v552
  %752 = vmatmul.bf16.gmra.mxu0 %v87
  %v753 = vpop.f32.mrf.mxu0
  %v754 = vadd.f32 %v740, %v753
  %v755 = vpop.f32.mrf.mxu0
  %v756 = vadd.f32 %v742, %v755
  %757 = vdwg.mxu0
  %758 = vmatpush.bf16.msra.mxu0 %v582
  %759 = vmatpush.bf16.msra.mxu0 %v580
  %760 = vmatpush.bf16.msra.mxu0 %v578
  %761 = vmatpush.bf16.msra.mxu0 %v576
  %762 = vmatpush.bf16.msra.mxu0 %v574
  %763 = vmatpush.bf16.msra.mxu0 %v572
  %764 = vmatpush.bf16.msra.mxu0 %v570
  %765 = vmatpush.bf16.msra.mxu0 %v568
  %766 = vmatmul.bf16.gmra.mxu0 %v88
  %v767 = vpop.f32.mrf.mxu0
  %v768 = vadd.f32 %v754, %v767
  %v769 = vpop.f32.mrf.mxu0
  %v770 = vadd.f32 %v756, %v769
  %771 = vdwg.mxu0
  %772 = vmatpush.bf16.msra.mxu0 0
  %773 = vmatpush.bf16.msra.mxu0 0
  %774 = vmatpush.bf16.msra.mxu0 0
  %775 = vmatpush.bf16.msra.mxu0 0
  %776 = vmatpush.bf16.msra.mxu0 0
  %777 = vmatpush.bf16.msra.mxu0 0
  %778 = vmatpush.bf16.msra.mxu0 0
  %779 = vmatpush.bf16.msra.mxu0 %v584
  %780 = vmatmul.bf16.gmra.mxu0 %v686
  %v781 = vpop.f32.mrf.mxu0
  %v782 = vadd.f32 %v768, %v781
  %v783 = vpop.f32.mrf.mxu0
  %v784 = vadd.f32 %v770, %v783
  %785 = vdwg.mxu0
  %786 = vmatpush.bf16.msra.mxu0 %v503
  %787 = vmatpush.bf16.msra.mxu0 %v501
  %788 = vmatpush.bf16.msra.mxu0 %v499
  %789 = vmatpush.bf16.msra.mxu0 %v497
  %790 = vmatpush.bf16.msra.mxu0 %v495
  %791 = vmatpush.bf16.msra.mxu0 %v493
  %792 = vmatpush.bf16.msra.mxu0 %v491
  %793 = vmatpush.bf16.msra.mxu0 %v489
  %794 = vmatmul.bf16.gmra.mxu0 %v83
  %v795 = vpop.f32.mrf.mxu0
  %v796 = vadd.f32 %v191, %v795
  %v797 = vpop.f32.mrf.mxu0
  %v798 = vadd.f32 %v191, %v797
  %799 = vdwg.mxu0
  %800 = vmatpush.bf16.msra.mxu0 %v519
  %801 = vmatpush.bf16.msra.mxu0 %v517
  %802 = vmatpush.bf16.msra.mxu0 %v515
  %803 = vmatpush.bf16.msra.mxu0 %v513
  %804 = vmatpush.bf16.msra.mxu0 %v511
  %805 = vmatpush.bf16.msra.mxu0 %v509
  %806 = vmatpush.bf16.msra.mxu0 %v507
  %807 = vmatpush.bf16.msra.mxu0 %v505
  %808 = vmatmul.bf16.gmra.mxu0 %v84
  %v809 = vpop.f32.mrf.mxu0
  %v810 = vadd.f32 %v796, %v809
  %v811 = vpop.f32.mrf.mxu0
  %v812 = vadd.f32 %v798, %v811
  %813 = vdwg.mxu0
  %814 = vmatpush.bf16.msra.mxu0 %v535
  %815 = vmatpush.bf16.msra.mxu0 %v533
  %816 = vmatpush.bf16.msra.mxu0 %v531
  %817 = vmatpush.bf16.msra.mxu0 %v529
  %818 = vmatpush.bf16.msra.mxu0 %v527
  %819 = vmatpush.bf16.msra.mxu0 %v525
  %820 = vmatpush.bf16.msra.mxu0 %v523
  %821 = vmatpush.bf16.msra.mxu0 %v521
  %822 = vmatmul.bf16.gmra.mxu0 %v85
  %v823 = vpop.f32.mrf.mxu0
  %v824 = vadd.f32 %v810, %v823
  %v825 = vpop.f32.mrf.mxu0
  %v826 = vadd.f32 %v812, %v825
  %827 = vdwg.mxu0
  %828 = vmatpush.bf16.msra.mxu0 %v551
  %829 = vmatpush.bf16.msra.mxu0 %v549
  %830 = vmatpush.bf16.msra.mxu0 %v547
  %831 = vmatpush.bf16.msra.mxu0 %v545
  %832 = vmatpush.bf16.msra.mxu0 %v543
  %833 = vmatpush.bf16.msra.mxu0 %v541
  %834 = vmatpush.bf16.msra.mxu0 %v539
  %835 = vmatpush.bf16.msra.mxu0 %v537
  %836 = vmatmul.bf16.gmra.mxu0 %v86
  %v837 = vpop.f32.mrf.mxu0
  %v838 = vadd.f32 %v824, %v837
  %v839 = vpop.f32.mrf.mxu0
  %v840 = vadd.f32 %v826, %v839
  %841 = vdwg.mxu0
  %842 = vmatpush.bf16.msra.mxu0 %v567
  %843 = vmatpush.bf16.msra.mxu0 %v565
  %844 = vmatpush.bf16.msra.mxu0 %v563
  %845 = vmatpush.bf16.msra.mxu0 %v561
  %846 = vmatpush.bf16.msra.mxu0 %v559
  %847 = vmatpush.bf16.msra.mxu0 %v557
  %848 = vmatpush.bf16.msra.mxu0 %v555
  %849 = vmatpush.bf16.msra.mxu0 %v553
  %850 = vmatmul.bf16.gmra.mxu0 %v87
  %v851 = vpop.f32.mrf.mxu0
  %v852 = vadd.f32 %v838, %v851
  %v853 = vpop.f32.mrf.mxu0
  %v854 = vadd.f32 %v840, %v853
  %855 = vdwg.mxu0
  %856 = vmatpush.bf16.msra.mxu0 %v583
  %857 = vmatpush.bf16.msra.mxu0 %v581
  %858 = vmatpush.bf16.msra.mxu0 %v579
  %859 = vmatpush.bf16.msra.mxu0 %v577
  %860 = vmatpush.bf16.msra.mxu0 %v575
  %861 = vmatpush.bf16.msra.mxu0 %v573
  %862 = vmatpush.bf16.msra.mxu0 %v571
  %863 = vmatpush.bf16.msra.mxu0 %v569
  %864 = vmatmul.bf16.gmra.mxu0 %v88
  %v865 = vpop.f32.mrf.mxu0
  %v866 = vadd.f32 %v852, %v865
  %v867 = vpop.f32.mrf.mxu0
  %v868 = vadd.f32 %v854, %v867
  %869 = vdwg.mxu0
  %870 = vmatpush.bf16.msra.mxu0 0
  %871 = vmatpush.bf16.msra.mxu0 0
  %872 = vmatpush.bf16.msra.mxu0 0
  %873 = vmatpush.bf16.msra.mxu0 0
  %874 = vmatpush.bf16.msra.mxu0 0
  %875 = vmatpush.bf16.msra.mxu0 0
  %876 = vmatpush.bf16.msra.mxu0 0
  %877 = vmatpush.bf16.msra.mxu0 %v585
  %878 = vmatmul.bf16.gmra.mxu0 %v686
  %v879 = vpop.f32.mrf.mxu0
  %v880 = vadd.f32 %v866, %v879
  %v881 = vpop.f32.mrf.mxu0
  %v882 = vadd.f32 %v868, %v881
  %883 = vdwg.mxu0
  %v884 = vmax.f32 %v782, 0.0
  %v885 = vmax.f32 %v880, 0.0
  %v886 = vmax.f32 %v784, 0.0
  %v887 = vmax.f32 %v882, 0.0
  %v888 = vpack.c.bf16 %v886, %v884
  %v889 = vpack.c.bf16 %v887, %v885
  %v890 = vld [vmem:[%s3] sm:$0xf]
  %v891 = vld [vmem:[%s3 + $0x4] sm:$0xf]
  %v892 = vld [vmem:[%s3 + $0x8] sm:$0xf]
  %v893 = vld [vmem:[%s3 + $0xc] sm:$0xf]
  %v894 = vld [vmem:[%s3 + $0x10] sm:$0xf]
  %v895 = vld [vmem:[%s3 + $0x14] sm:$0xf]
  %v896 = vld [vmem:[%s3 + $0x18] sm:$0xf]
  %v897 = vld [vmem:[%s3 + $0x1c] sm:$0xf]
  %v898 = vld [vmem:[%s3 + $0x20] sm:$0xf]
  %v899 = vld [vmem:[%s3 + $0x24] sm:$0xf]
  %v900 = vld [vmem:[%s3 + $0x28] sm:$0xf]
  %v901 = vld [vmem:[%s3 + $0x2c] sm:$0xf]
  %v902 = vld [vmem:[%s3 + $0x30] sm:$0xf]
  %v903 = vld [vmem:[%s3 + $0x34] sm:$0xf]
  %v904 = vld [vmem:[%s3 + $0x38] sm:$0xf]
  %v905 = vld [vmem:[%s3 + $0x3c] sm:$0xf]
  %v906 = vld [vmem:[%s3 + $0x40] sm:$0xf]
  %v907 = vld [vmem:[%s3 + $0x44] sm:$0xf]
  %v908 = vld [vmem:[%s3 + $0x48] sm:$0xf]
  %v909 = vld [vmem:[%s3 + $0x4c] sm:$0xf]
  %v910 = vld [vmem:[%s3 + $0x50] sm:$0xf]
  %v911 = vld [vmem:[%s3 + $0x54] sm:$0xf]
  %v912 = vld [vmem:[%s3 + $0x58] sm:$0xf]
  %v913 = vld [vmem:[%s3 + $0x5c] sm:$0xf]
  %v914 = vld [vmem:[%s3 + $0x60] sm:$0xf]
  %v915 = vld [vmem:[%s3 + $0x64] sm:$0xf]
  %v916 = vld [vmem:[%s3 + $0x68] sm:$0xf]
  %v917 = vld [vmem:[%s3 + $0x6c] sm:$0xf]
  %v918 = vld [vmem:[%s3 + $0x70] sm:$0xf]
  %v919 = vld [vmem:[%s3 + $0x74] sm:$0xf]
  %v920 = vld [vmem:[%s3 + $0x78] sm:$0xf]
  %v921 = vld [vmem:[%s3 + $0x7c] sm:$0xf]
  %v922 = vld [vmem:[%s4] sm:$0x1]
  %v924 = vperm.slane %v922, 0
  %v958 = vunpack.c.l.b16 %v890
  %v959 = vunpack.c.l.b16 %v891
  %v960 = vunpack.c.l.b16 %v892
  %v961 = vunpack.c.l.b16 %v893
  %v962 = vunpack.c.l.b16 %v894
  %v963 = vunpack.c.l.b16 %v895
  %v964 = vunpack.c.l.b16 %v896
  %v965 = vunpack.c.l.b16 %v897
  %v966 = vunpack.c.l.b16 %v898
  %v967 = vunpack.c.l.b16 %v899
  %v968 = vunpack.c.l.b16 %v900
  %v969 = vunpack.c.l.b16 %v901
  %v970 = vunpack.c.l.b16 %v902
  %v971 = vunpack.c.l.b16 %v903
  %v972 = vunpack.c.l.b16 %v904
  %v973 = vunpack.c.l.b16 %v905
  %v974 = vunpack.c.l.b16 %v906
  %v975 = vunpack.c.l.b16 %v907
  %v976 = vunpack.c.l.b16 %v908
  %v977 = vunpack.c.l.b16 %v909
  %v978 = vunpack.c.l.b16 %v910
  %v979 = vunpack.c.l.b16 %v911
  %v980 = vunpack.c.l.b16 %v912
  %v981 = vunpack.c.l.b16 %v913
  %v982 = vunpack.c.l.b16 %v914
  %v983 = vunpack.c.l.b16 %v915
  %v984 = vunpack.c.l.b16 %v916
  %v985 = vunpack.c.l.b16 %v917
  %v986 = vunpack.c.l.b16 %v918
  %v987 = vunpack.c.l.b16 %v919
  %v988 = vunpack.c.l.b16 %v920
  %v989 = vunpack.c.l.b16 %v921
  %v990 = vpack.c.b16 %v959, %v958
  %v991 = vpack.c.b16 %v961, %v960
  %v992 = vpack.c.b16 %v963, %v962
  %v993 = vpack.c.b16 %v965, %v964
  %v994 = vpack.c.b16 %v967, %v966
  %v995 = vpack.c.b16 %v969, %v968
  %v996 = vpack.c.b16 %v971, %v970
  %v997 = vpack.c.b16 %v973, %v972
  %v998 = vpack.c.b16 %v975, %v974
  %v999 = vpack.c.b16 %v977, %v976
  %v1000 = vpack.c.b16 %v979, %v978
  %v1001 = vpack.c.b16 %v981, %v980
  %v1002 = vpack.c.b16 %v983, %v982
  %v1003 = vpack.c.b16 %v985, %v984
  %v1004 = vpack.c.b16 %v987, %v986
  %v1005 = vpack.c.b16 %v989, %v988
  %1022 = vmatpush.bf16.msra.mxu0 %v997
  %1023 = vmatpush.bf16.msra.mxu0 %v996
  %1024 = vmatpush.bf16.msra.mxu0 %v995
  %1025 = vmatpush.bf16.msra.mxu0 %v994
  %1026 = vmatpush.bf16.msra.mxu0 %v993
  %1027 = vmatpush.bf16.msra.mxu0 %v992
  %1028 = vmatpush.bf16.msra.mxu0 %v991
  %1029 = vmatpush.bf16.msra.mxu0 %v990
  %1030 = vmatmul.bf16.gmra.mxu0 %v888
  %v1031 = vpop.f32.mrf.mxu0
  %v1032 = vadd.f32 %v924, %v1031
  %v1033 = vpop.f32.mrf.mxu0
  %v1034 = vadd.f32 %v924, %v1033
  %1035 = vdwg.mxu0
  %1036 = vmatpush.bf16.msra.mxu0 %v1005
  %1037 = vmatpush.bf16.msra.mxu0 %v1004
  %1038 = vmatpush.bf16.msra.mxu0 %v1003
  %1039 = vmatpush.bf16.msra.mxu0 %v1002
  %1040 = vmatpush.bf16.msra.mxu0 %v1001
  %1041 = vmatpush.bf16.msra.mxu0 %v1000
  %1042 = vmatpush.bf16.msra.mxu0 %v999
  %1043 = vmatpush.bf16.msra.mxu0 %v998
  %1044 = vmatmul.bf16.gmra.mxu0 %v889
  %v1045 = vpop.f32.mrf.mxu0
  %v1046 = vadd.f32 %v1032, %v1045
  %v1047 = vpop.f32.mrf.mxu0
  %v1048 = vadd.f32 %v1034, %v1047
  %1049 = vdwg.mxu0
  %v1050 = vmax.f32 %v1046, 0.0
  %v1051 = vmax.f32 %v1048, 0.0
  %v1052 = vpack.c.bf16 %v1051, %v1050
  %v1053 = vld [vmem:[%s5] sm:$0xf]
  %v1054 = vld [vmem:[%s5 + $0x4] sm:$0xf]
  %v1055 = vld [vmem:[%s5 + $0x8] sm:$0xf]
  %v1056 = vld [vmem:[%s5 + $0xc] sm:$0xf]
  %v1057 = vld [vmem:[%s5 + $0x10] sm:$0xf]
  %v1058 = vld [vmem:[%s5 + $0x14] sm:$0xf]
  %v1059 = vld [vmem:[%s5 + $0x18] sm:$0xf]
  %v1060 = vld [vmem:[%s5 + $0x1c] sm:$0xf]
  %v1061 = vld [vmem:[%s5 + $0x20] sm:$0xf]
  %v1062 = vld [vmem:[%s5 + $0x24] sm:$0xf]
  %v1063 = vld [vmem:[%s5 + $0x28] sm:$0xf]
  %v1064 = vld [vmem:[%s5 + $0x2c] sm:$0xf]
  %v1065 = vld [vmem:[%s5 + $0x30] sm:$0xf]
  %v1066 = vld [vmem:[%s5 + $0x34] sm:$0xf]
  %v1067 = vld [vmem:[%s5 + $0x38] sm:$0xf]
  %v1068 = vld [vmem:[%s5 + $0x3c] sm:$0xf]
  %v1069 = vld [vmem:[%s6] sm:$0x1]
  %v1071 = vperm.slane %v1069, 0
  %v1089 = vunpack.c.l.b16 %v1053
  %v1090 = vunpack.c.l.b16 %v1054
  %v1091 = vunpack.c.l.b16 %v1055
  %v1092 = vunpack.c.l.b16 %v1056
  %v1093 = vunpack.c.l.b16 %v1057
  %v1094 = vunpack.c.l.b16 %v1058
  %v1095 = vunpack.c.l.b16 %v1059
  %v1096 = vunpack.c.l.b16 %v1060
  %v1097 = vunpack.c.l.b16 %v1061
  %v1098 = vunpack.c.l.b16 %v1062
  %v1099 = vunpack.c.l.b16 %v1063
  %v1100 = vunpack.c.l.b16 %v1064
  %v1101 = vunpack.c.l.b16 %v1065
  %v1102 = vunpack.c.l.b16 %v1066
  %v1103 = vunpack.c.l.b16 %v1067
  %v1104 = vunpack.c.l.b16 %v1068
  %v1105 = vpack.c.b16 %v1090, %v1089
  %v1106 = vpack.c.b16 %v1092, %v1091
  %v1107 = vpack.c.b16 %v1094, %v1093
  %v1108 = vpack.c.b16 %v1096, %v1095
  %v1109 = vpack.c.b16 %v1098, %v1097
  %v1110 = vpack.c.b16 %v1100, %v1099
  %v1111 = vpack.c.b16 %v1102, %v1101
  %v1112 = vpack.c.b16 %v1104, %v1103
  %1121 = vmatpush.bf16.msra.mxu0 %v1112
  %1122 = vmatpush.bf16.msra.mxu0 %v1111
  %1123 = vmatpush.bf16.msra.mxu0 %v1110
  %1124 = vmatpush.bf16.msra.mxu0 %v1109
  %1125 = vmatpush.bf16.msra.mxu0 %v1108
  %1126 = vmatpush.bf16.msra.mxu0 %v1107
  %1127 = vmatpush.bf16.msra.mxu0 %v1106
  %1128 = vmatpush.bf16.msra.mxu0 %v1105
  %1129 = vmatmul.bf16.gmra.mxu0 %v1052
  %v1130 = vpop.f32.mrf.mxu0
  %v1131 = vadd.f32 %v1071, %v1130
  %v1132 = vpop.f32.mrf.mxu0
  %v1133 = vadd.f32 %v1071, %v1132
  %1134 = vdwg.mxu0
  %v1135 = vmax.f32 %v1131, 0.0
  %v1136 = vmax.f32 %v1133, 0.0
  %v1137 = vpack.c.bf16 %v1136, %v1135
  %v1138 = vld [vmem:[%s7] sm:$0xf]
  %v1139 = vld [vmem:[%s7 + $0x4] sm:$0xf]
  %v1140 = vld [vmem:[%s7 + $0x8] sm:$0xf]
  %v1141 = vld [vmem:[%s7 + $0xc] sm:$0xf]
  %v1142 = vld [vmem:[%s7 + $0x10] sm:$0xf]
  %v1143 = vld [vmem:[%s7 + $0x14] sm:$0xf]
  %v1144 = vld [vmem:[%s7 + $0x18] sm:$0xf]
  %v1145 = vld [vmem:[%s7 + $0x1c] sm:$0xf]
  %v1146 = vld [vmem:[%s8] sm:$0x1]
  %v1148 = vperm.slane %v1146, 0
  %v1158 = vunpack.c.l.b16 %v1138
  %v1159 = vunpack.c.l.b16 %v1139
  %v1160 = vunpack.c.l.b16 %v1140
  %v1161 = vunpack.c.l.b16 %v1141
  %v1162 = vunpack.c.l.b16 %v1142
  %v1163 = vunpack.c.l.b16 %v1143
  %v1164 = vunpack.c.l.b16 %v1144
  %v1165 = vunpack.c.l.b16 %v1145
  %v1166 = vpack.c.b16 %v1159, %v1158
  %v1167 = vpack.c.b16 %v1161, %v1160
  %v1168 = vpack.c.b16 %v1163, %v1162
  %v1169 = vpack.c.b16 %v1165, %v1164
  %vm1174 = vcmask 523264
  %v1176 = vsel %vm1174, %v1137, 0
  %1178 = vmatpush.bf16.msra.mxu0 0
  %1179 = vmatpush.bf16.msra.mxu0 0
  %1180 = vmatpush.bf16.msra.mxu0 0
  %1181 = vmatpush.bf16.msra.mxu0 0
  %1182 = vmatpush.bf16.msra.mxu0 %v1169
  %1183 = vmatpush.bf16.msra.mxu0 %v1168
  %1184 = vmatpush.bf16.msra.mxu0 %v1167
  %1185 = vmatpush.bf16.msra.mxu0 %v1166
  %1186 = vmatmul.bf16.gmra.mxu0 %v1176
  %v1187 = vpop.f32.mrf.mxu0
  %v1188 = vadd.f32 %v1148, %v1187
  %v1189 = vpop.f32.mrf.mxu0
  %v1190 = vadd.f32 %v1148, %v1189
  %1191 = vdwg.mxu0
  %v1192 = vmax.f32 %v1188, 0.0
  %v1193 = vmax.f32 %v1190, 0.0
  %v1194 = vpack.c.bf16 %v1193, %v1192
  %v1195 = vld [vmem:[%s9] sm:$0xf]
  %v1196 = vld [vmem:[%s9 + $0x4] sm:$0xf]
  %v1197 = vld [vmem:[%s9 + $0x8] sm:$0xf]
  %v1198 = vld [vmem:[%s9 + $0xc] sm:$0xf]
  %v1199 = vld [vmem:[%s10] sm:$0x1]
  %v1201 = vperm.slane %v1199, 0
  %v1207 = vunpack.c.l.b16 %v1195
  %v1208 = vunpack.c.l.b16 %v1196
  %v1209 = vunpack.c.l.b16 %v1197
  %v1210 = vunpack.c.l.b16 %v1198
  %v1211 = vpack.c.b16 %v1208, %v1207
  %v1212 = vpack.c.b16 %v1210, %v1209
  %vm1215 = vcmask 261120
  %v1217 = vsel %vm1215, %v1194, 0
  %1219 = vmatpush.bf16.msra.mxu0 0
  %1220 = vmatpush.bf16.msra.mxu0 0
  %1221 = vmatpush.bf16.msra.mxu0 0
  %1222 = vmatpush.bf16.msra.mxu0 0
  %1223 = vmatpush.bf16.msra.mxu0 0
  %1224 = vmatpush.bf16.msra.mxu0 0
  %1225 = vmatpush.bf16.msra.mxu0 %v1212
  %1226 = vmatpush.bf16.msra.mxu0 %v1211
  %1227 = vmatmul.bf16.gmra.mxu0 %v1217
  %v1228 = vpop.f32.mrf.mxu0
  %v1229 = vadd.f32 %v1201, %v1228
  %v1230 = vpop.f32.mrf.mxu0
  %v1231 = vadd.f32 %v1201, %v1230
  %1232 = vdwg.mxu0
  %v1233 = vmax.f32 %v1229, 0.0
  %v1234 = vmax.f32 %v1231, 0.0
  %v1235 = vpack.c.bf16 %v1234, %v1233
  %v1236 = vld [vmem:[%s11] sm:$0xf]
  %v1237 = vld [vmem:[%s11 + $0x4] sm:$0xf]
  %v1238 = vld [vmem:[%s12] sm:$0x1]
  %v1240 = vperm.slane %v1238, 0
  %v1244 = vunpack.c.l.b16 %v1236
  %v1245 = vunpack.c.l.b16 %v1237
  %v1246 = vpack.c.b16 %v1245, %v1244
  %v1249 = vsel %vm684, %v1235, 0
  %1251 = vmatpush.bf16.msra.mxu0 0
  %1252 = vmatpush.bf16.msra.mxu0 0
  %1253 = vmatpush.bf16.msra.mxu0 0
  %1254 = vmatpush.bf16.msra.mxu0 0
  %1255 = vmatpush.bf16.msra.mxu0 0
  %1256 = vmatpush.bf16.msra.mxu0 0
  %1257 = vmatpush.bf16.msra.mxu0 0
  %1258 = vmatpush.bf16.msra.mxu0 %v1246
  %1259 = vmatmul.bf16.gmra.mxu0 %v1249
  %v1260 = vpop.f32.mrf.mxu0
  %v1261 = vadd.f32 %v1240, %v1260
  %v1262 = vpop.f32.mrf.mxu0
  %v1263 = vadd.f32 %v1240, %v1262
  %1264 = vdwg.mxu0
  %v1265 = vmax.f32 %v1261, 0.0
  %v1266 = vmax.f32 %v1263, 0.0
  %v1267 = vpack.c.bf16 %v1266, %v1265
  %v1268 = vld [vmem:[%s13] sm:$0xf]
  %v1269 = vld [vmem:[%s13 + $0x4] sm:$0xf]
  %v1270 = vld [vmem:[%s13 + $0x8] sm:$0xf]
  %v1271 = vld [vmem:[%s13 + $0xc] sm:$0xf]
  %v1272 = vld [vmem:[%s14] sm:$0x1]
  %v1274 = vperm.slane %v1272, 0
  %v1280 = vunpack.c.l.b16 %v1268
  %v1281 = vunpack.c.l.b16 %v1269
  %v1282 = vunpack.c.l.b16 %v1270
  %v1283 = vunpack.c.l.b16 %v1271
  %v1284 = vpack.c.b16 %v1281, %v1280
  %v1285 = vpack.c.b16 %v1283, %v1282
  %v1289 = vsel %vm1215, %v1267, 0
  %1291 = vmatpush.bf16.msra.mxu0 0
  %1292 = vmatpush.bf16.msra.mxu0 0
  %1293 = vmatpush.bf16.msra.mxu0 0
  %1294 = vmatpush.bf16.msra.mxu0 0
  %1295 = vmatpush.bf16.msra.mxu0 0
  %1296 = vmatpush.bf16.msra.mxu0 0
  %1297 = vmatpush.bf16.msra.mxu0 %v1285
  %1298 = vmatpush.bf16.msra.mxu0 %v1284
  %1299 = vmatmul.bf16.gmra.mxu0 %v1289
  %v1300 = vpop.f32.mrf.mxu0
  %v1301 = vadd.f32 %v1274, %v1300
  %v1302 = vpop.f32.mrf.mxu0
  %v1303 = vadd.f32 %v1274, %v1302
  %1304 = vdwg.mxu0
  %v1305 = vmax.f32 %v1301, 0.0
  %v1306 = vmax.f32 %v1303, 0.0
  %v1307 = vpack.c.bf16 %v1306, %v1305
  %v1308 = vld [vmem:[%s15] sm:$0xf]
  %v1309 = vld [vmem:[%s15 + $0x4] sm:$0xf]
  %v1310 = vld [vmem:[%s15 + $0x8] sm:$0xf]
  %v1311 = vld [vmem:[%s15 + $0xc] sm:$0xf]
  %v1312 = vld [vmem:[%s15 + $0x10] sm:$0xf]
  %v1313 = vld [vmem:[%s15 + $0x14] sm:$0xf]
  %v1314 = vld [vmem:[%s15 + $0x18] sm:$0xf]
  %v1315 = vld [vmem:[%s15 + $0x1c] sm:$0xf]
  %v1316 = vld [vmem:[%s16] sm:$0x1]
  %v1318 = vperm.slane %v1316, 0
  %v1328 = vunpack.c.l.b16 %v1308
  %v1329 = vunpack.c.l.b16 %v1309
  %v1330 = vunpack.c.l.b16 %v1310
  %v1331 = vunpack.c.l.b16 %v1311
  %v1332 = vunpack.c.l.b16 %v1312
  %v1333 = vunpack.c.l.b16 %v1313
  %v1334 = vunpack.c.l.b16 %v1314
  %v1335 = vunpack.c.l.b16 %v1315
  %v1336 = vpack.c.b16 %v1329, %v1328
  %v1337 = vpack.c.b16 %v1331, %v1330
  %v1338 = vpack.c.b16 %v1333, %v1332
  %v1339 = vpack.c.b16 %v1335, %v1334
  %v1345 = vsel %vm1174, %v1307, 0
  %1347 = vmatpush.bf16.msra.mxu0 0
  %1348 = vmatpush.bf16.msra.mxu0 0
  %1349 = vmatpush.bf16.msra.mxu0 0
  %1350 = vmatpush.bf16.msra.mxu0 0
  %1351 = vmatpush.bf16.msra.mxu0 %v1339
  %1352 = vmatpush.bf16.msra.mxu0 %v1338
  %1353 = vmatpush.bf16.msra.mxu0 %v1337
  %1354 = vmatpush.bf16.msra.mxu0 %v1336
  %1355 = vmatmul.bf16.gmra.mxu0 %v1345
  %v1356 = vpop.f32.mrf.mxu0
  %v1357 = vadd.f32 %v1318, %v1356
  %v1358 = vpop.f32.mrf.mxu0
  %v1359 = vadd.f32 %v1318, %v1358
  %1360 = vdwg.mxu0
  %v1361 = vmax.f32 %v1357, 0.0
  %v1362 = vmax.f32 %v1359, 0.0
  %v1363 = vpack.c.bf16 %v1362, %v1361
  %v1364 = vld [vmem:[%s17] sm:$0xff]
  %v1365 = vld [vmem:[%s17 + $0x8] sm:$0xff]
  %v1366 = vld [vmem:[%s17 + $0x10] sm:$0xff]
  %v1367 = vld [vmem:[%s17 + $0x18] sm:$0xff]
  %v1368 = vld [vmem:[%s17 + $0x20] sm:$0xff]
  %v1369 = vld [vmem:[%s17 + $0x28] sm:$0xff]
  %v1370 = vld [vmem:[%s17 + $0x30] sm:$0xff]
  %v1371 = vld [vmem:[%s17 + $0x38] sm:$0xff]
  %v1372 = vld [vmem:[%s17 + $0x40] sm:$0xff]
  %v1373 = vld [vmem:[%s17 + $0x48] sm:$0xff]
  %v1374 = vld [vmem:[%s17 + $0x50] sm:$0xff]
  %v1375 = vld [vmem:[%s17 + $0x58] sm:$0xff]
  %v1376 = vld [vmem:[%s17 + $0x60] sm:$0xff]
  %v1377 = vld [vmem:[%s17 + $0x68] sm:$0xff]
  %v1378 = vld [vmem:[%s17 + $0x70] sm:$0xff]
  %v1379 = vld [vmem:[%s17 + $0x78] sm:$0xff]
  %v1380 = vld [vmem:[%s18] sm:$0x3]
  %v1382 = vperm.slane %v1380, 0
  %v1383 = vperm.slane %v1380, 1
  %v1402 = vunpack.c.l.b16 %v1364
  %v1403 = vunpack.c.h.b16 %v1364
  %v1404 = vunpack.c.l.b16 %v1365
  %v1405 = vunpack.c.h.b16 %v1365
  %v1406 = vunpack.c.l.b16 %v1366
  %v1407 = vunpack.c.h.b16 %v1366
  %v1408 = vunpack.c.l.b16 %v1367
  %v1409 = vunpack.c.h.b16 %v1367
  %v1410 = vunpack.c.l.b16 %v1368
  %v1411 = vunpack.c.h.b16 %v1368
  %v1412 = vunpack.c.l.b16 %v1369
  %v1413 = vunpack.c.h.b16 %v1369
  %v1414 = vunpack.c.l.b16 %v1370
  %v1415 = vunpack.c.h.b16 %v1370
  %v1416 = vunpack.c.l.b16 %v1371
  %v1417 = vunpack.c.h.b16 %v1371
  %v1418 = vunpack.c.l.b16 %v1372
  %v1419 = vunpack.c.h.b16 %v1372
  %v1420 = vunpack.c.l.b16 %v1373
  %v1421 = vunpack.c.h.b16 %v1373
  %v1422 = vunpack.c.l.b16 %v1374
  %v1423 = vunpack.c.h.b16 %v1374
  %v1424 = vunpack.c.l.b16 %v1375
  %v1425 = vunpack.c.h.b16 %v1375
  %v1426 = vunpack.c.l.b16 %v1376
  %v1427 = vunpack.c.h.b16 %v1376
  %v1428 = vunpack.c.l.b16 %v1377
  %v1429 = vunpack.c.h.b16 %v1377
  %v1430 = vunpack.c.l.b16 %v1378
  %v1431 = vunpack.c.h.b16 %v1378
  %v1432 = vunpack.c.l.b16 %v1379
  %v1433 = vunpack.c.h.b16 %v1379
  %v1434 = vpack.c.b16 %v1404, %v1402
  %v1435 = vpack.c.b16 %v1405, %v1403
  %v1436 = vpack.c.b16 %v1408, %v1406
  %v1437 = vpack.c.b16 %v1409, %v1407
  %v1438 = vpack.c.b16 %v1412, %v1410
  %v1439 = vpack.c.b16 %v1413, %v1411
  %v1440 = vpack.c.b16 %v1416, %v1414
  %v1441 = vpack.c.b16 %v1417, %v1415
  %v1442 = vpack.c.b16 %v1420, %v1418
  %v1443 = vpack.c.b16 %v1421, %v1419
  %v1444 = vpack.c.b16 %v1424, %v1422
  %v1445 = vpack.c.b16 %v1425, %v1423
  %v1446 = vpack.c.b16 %v1428, %v1426
  %v1447 = vpack.c.b16 %v1429, %v1427
  %v1448 = vpack.c.b16 %v1432, %v1430
  %v1449 = vpack.c.b16 %v1433, %v1431
  %1466 = vmatpush.bf16.msra.mxu0 %v1448
  %1467 = vmatpush.bf16.msra.mxu0 %v1446
  %1468 = vmatpush.bf16.msra.mxu0 %v1444
  %1469 = vmatpush.bf16.msra.mxu0 %v1442
  %1470 = vmatpush.bf16.msra.mxu0 %v1440
  %1471 = vmatpush.bf16.msra.mxu0 %v1438
  %1472 = vmatpush.bf16.msra.mxu0 %v1436
  %1473 = vmatpush.bf16.msra.mxu0 %v1434
  %1474 = vmatmul.bf16.gmra.mxu0 %v1363
  %v1475 = vpop.f32.mrf.mxu0
  %v1476 = vadd.f32 %v1382, %v1475
  %v1477 = vpop.f32.mrf.mxu0
  %v1478 = vadd.f32 %v1382, %v1477
  %1479 = vdwg.mxu0
  %1480 = vmatpush.bf16.msra.mxu0 %v1449
  %1481 = vmatpush.bf16.msra.mxu0 %v1447
  %1482 = vmatpush.bf16.msra.mxu0 %v1445
  %1483 = vmatpush.bf16.msra.mxu0 %v1443
  %1484 = vmatpush.bf16.msra.mxu0 %v1441
  %1485 = vmatpush.bf16.msra.mxu0 %v1439
  %1486 = vmatpush.bf16.msra.mxu0 %v1437
  %1487 = vmatpush.bf16.msra.mxu0 %v1435
  %1488 = vmatmul.bf16.gmra.mxu0 %v1363
  %v1489 = vpop.f32.mrf.mxu0
  %v1490 = vadd.f32 %v1383, %v1489
  %v1491 = vpop.f32.mrf.mxu0
  %v1492 = vadd.f32 %v1383, %v1491
  %1493 = vdwg.mxu0
  %v1494 = vmax.f32 %v1476, 0.0
  %v1495 = vmax.f32 %v1490, 0.0
  %v1496 = vmax.f32 %v1478, 0.0
  %v1497 = vmax.f32 %v1492, 0.0
  %v1498 = vpack.c.bf16 %v1496, %v1494
  %v1499 = vpack.c.bf16 %v1497, %v1495
  %v1500 = vld [vmem:[%s19] sm:$0xff]
  %v1501 = vld [vmem:[%s19 + $0x8] sm:$0xff]
  %v1502 = vld [vmem:[%s19 + $0x10] sm:$0xff]
  %v1503 = vld [vmem:[%s19 + $0x18] sm:$0xf]
  %v1504 = vld [vmem:[%s19 + $0x1c] sm:$0xff]
  %v1505 = vld [vmem:[%s19 + $0x24] sm:$0xff]
  %v1506 = vld [vmem:[%s19 + $0x2c] sm:$0xff]
  %v1507 = vld [vmem:[%s19 + $0x34] sm:$0xf]
  %v1508 = vld [vmem:[%s19 + $0x38] sm:$0xff]
  %v1509 = vld [vmem:[%s19 + $0x40] sm:$0xff]
  %v1510 = vld [vmem:[%s19 + $0x48] sm:$0xff]
  %v1511 = vld [vmem:[%s19 + $0x50] sm:$0xf]
  %v1512 = vld [vmem:[%s19 + $0x54] sm:$0xff]
  %v1513 = vld [vmem:[%s19 + $0x5c] sm:$0xff]
  %v1514 = vld [vmem:[%s19 + $0x64] sm:$0xff]
  %v1515 = vld [vmem:[%s19 + $0x6c] sm:$0xf]
  %v1516 = vld [vmem:[%s19 + $0x70] sm:$0xff]
  %v1517 = vld [vmem:[%s19 + $0x78] sm:$0xff]
  %v1518 = vld [vmem:[%s19 + $0x80] sm:$0xff]
  %v1519 = vld [vmem:[%s19 + $0x88] sm:$0xf]
  %v1520 = vld [vmem:[%s19 + $0x8c] sm:$0xff]
  %v1521 = vld [vmem:[%s19 + $0x94] sm:$0xff]
  %v1522 = vld [vmem:[%s19 + $0x9c] sm:$0xff]
  %v1523 = vld [vmem:[%s19 + $0xa4] sm:$0xf]
  %v1524 = vld [vmem:[%s19 + $0xa8] sm:$0xff]
  %v1525 = vld [vmem:[%s19 + $0xb0] sm:$0xff]
  %v1526 = vld [vmem:[%s19 + $0xb8] sm:$0xff]
  %v1527 = vld [vmem:[%s19 + $0xc0] sm:$0xf]
  %v1528 = vld [vmem:[%s19 + $0xc4] sm:$0xff]
  %v1529 = vld [vmem:[%s19 + $0xcc] sm:$0xff]
  %v1530 = vld [vmem:[%s19 + $0xd4] sm:$0xff]
  %v1531 = vld [vmem:[%s19 + $0xdc] sm:$0xf]
  %v1532 = vld [vmem:[%s19 + $0xe0] sm:$0xff]
  %v1533 = vld [vmem:[%s19 + $0xe8] sm:$0xff]
  %v1534 = vld [vmem:[%s19 + $0xf0] sm:$0xff]
  %v1535 = vld [vmem:[%s19 + $0xf8] sm:$0xf]
  %v1536 = vld [vmem:[%s19 + $0xfc] sm:$0xff]
  %v1537 = vld [vmem:[%s19 + $0x104] sm:$0xff]
  %v1538 = vld [vmem:[%s19 + $0x10c] sm:$0xff]
  %v1539 = vld [vmem:[%s19 + $0x114] sm:$0xf]
  %v1540 = vld [vmem:[%s19 + $0x118] sm:$0xff]
  %v1541 = vld [vmem:[%s19 + $0x120] sm:$0xff]
  %v1542 = vld [vmem:[%s19 + $0x128] sm:$0xff]
  %v1543 = vld [vmem:[%s19 + $0x130] sm:$0xf]
  %v1544 = vld [vmem:[%s19 + $0x134] sm:$0xff]
  %v1545 = vld [vmem:[%s19 + $0x13c] sm:$0xff]
  %v1546 = vld [vmem:[%s19 + $0x144] sm:$0xff]
  %v1547 = vld [vmem:[%s19 + $0x14c] sm:$0xf]
  %v1548 = vld [vmem:[%s19 + $0x150] sm:$0xff]
  %v1549 = vld [vmem:[%s19 + $0x158] sm:$0xff]
  %v1550 = vld [vmem:[%s19 + $0x160] sm:$0xff]
  %v1551 = vld [vmem:[%s19 + $0x168] sm:$0xf]
  %v1552 = vld [vmem:[%s19 + $0x16c] sm:$0xff]
  %v1553 = vld [vmem:[%s19 + $0x174] sm:$0xff]
  %v1554 = vld [vmem:[%s19 + $0x17c] sm:$0xff]
  %v1555 = vld [vmem:[%s19 + $0x184] sm:$0xf]
  %v1556 = vld [vmem:[%s19 + $0x188] sm:$0xff]
  %v1557 = vld [vmem:[%s19 + $0x190] sm:$0xff]
  %v1558 = vld [vmem:[%s19 + $0x198] sm:$0xff]
  %v1559 = vld [vmem:[%s19 + $0x1a0] sm:$0xf]
  %v1560 = vld [vmem:[%s19 + $0x1a4] sm:$0xff]
  %v1561 = vld [vmem:[%s19 + $0x1ac] sm:$0xff]
  %v1562 = vld [vmem:[%s19 + $0x1b4] sm:$0xff]
  %v1563 = vld [vmem:[%s19 + $0x1bc] sm:$0xf]
  %v1564 = vld [vmem:[%s19 + $0x1c0] sm:$0xff]
  %v1565 = vld [vmem:[%s19 + $0x1c8] sm:$0xff]
  %v1566 = vld [vmem:[%s19 + $0x1d0] sm:$0xff]
  %v1567 = vld [vmem:[%s19 + $0x1d8] sm:$0xf]
  %v1568 = vld [vmem:[%s19 + $0x1dc] sm:$0xff]
  %v1569 = vld [vmem:[%s19 + $0x1e4] sm:$0xff]
  %v1570 = vld [vmem:[%s19 + $0x1ec] sm:$0xff]
  %v1571 = vld [vmem:[%s19 + $0x1f4] sm:$0xf]
  %v1572 = vld [vmem:[%s19 + $0x1f8] sm:$0xff]
  %v1573 = vld [vmem:[%s19 + $0x200] sm:$0xff]
  %v1574 = vld [vmem:[%s19 + $0x208] sm:$0xff]
  %v1575 = vld [vmem:[%s19 + $0x210] sm:$0xf]
  %v1576 = vld [vmem:[%s19 + $0x214] sm:$0xff]
  %v1577 = vld [vmem:[%s19 + $0x21c] sm:$0xff]
  %v1578 = vld [vmem:[%s19 + $0x224] sm:$0xff]
  %v1579 = vld [vmem:[%s19 + $0x22c] sm:$0xf]
  %v1580 = vld [vmem:[%s19 + $0x230] sm:$0xff]
  %v1581 = vld [vmem:[%s19 + $0x238] sm:$0xff]
  %v1582 = vld [vmem:[%s19 + $0x240] sm:$0xff]
  %v1583 = vld [vmem:[%s19 + $0x248] sm:$0xf]
  %v1584 = vld [vmem:[%s19 + $0x24c] sm:$0xff]
  %v1585 = vld [vmem:[%s19 + $0x254] sm:$0xff]
  %v1586 = vld [vmem:[%s19 + $0x25c] sm:$0xff]
  %v1587 = vld [vmem:[%s19 + $0x264] sm:$0xf]
  %v1588 = vld [vmem:[%s19 + $0x268] sm:$0xff]
  %v1589 = vld [vmem:[%s19 + $0x270] sm:$0xff]
  %v1590 = vld [vmem:[%s19 + $0x278] sm:$0xff]
  %v1591 = vld [vmem:[%s19 + $0x280] sm:$0xf]
  %v1592 = vld [vmem:[%s19 + $0x284] sm:$0xff]
  %v1593 = vld [vmem:[%s19 + $0x28c] sm:$0xff]
  %v1594 = vld [vmem:[%s19 + $0x294] sm:$0xff]
  %v1595 = vld [vmem:[%s19 + $0x29c] sm:$0xf]
  %v1596 = vld [vmem:[%s19 + $0x2a0] sm:$0xff]
  %v1597 = vld [vmem:[%s19 + $0x2a8] sm:$0xff]
  %v1598 = vld [vmem:[%s19 + $0x2b0] sm:$0xff]
  %v1599 = vld [vmem:[%s19 + $0x2b8] sm:$0xf]
  %v1600 = vld [vmem:[%s19 + $0x2bc] sm:$0xff]
  %v1601 = vld [vmem:[%s19 + $0x2c4] sm:$0xff]
  %v1602 = vld [vmem:[%s19 + $0x2cc] sm:$0xff]
  %v1603 = vld [vmem:[%s19 + $0x2d4] sm:$0xf]
  %v1604 = vld [vmem:[%s19 + $0x2d8] sm:$0xff]
  %v1605 = vld [vmem:[%s19 + $0x2e0] sm:$0xff]
  %v1606 = vld [vmem:[%s19 + $0x2e8] sm:$0xff]
  %v1607 = vld [vmem:[%s19 + $0x2f0] sm:$0xf]
  %v1608 = vld [vmem:[%s19 + $0x2f4] sm:$0xff]
  %v1609 = vld [vmem:[%s19 + $0x2fc] sm:$0xff]
  %v1610 = vld [vmem:[%s19 + $0x304] sm:$0xff]
  %v1611 = vld [vmem:[%s19 + $0x30c] sm:$0xf]
  %v1612 = vld [vmem:[%s19 + $0x310] sm:$0xff]
  %v1613 = vld [vmem:[%s19 + $0x318] sm:$0xff]
  %v1614 = vld [vmem:[%s19 + $0x320] sm:$0xff]
  %v1615 = vld [vmem:[%s19 + $0x328] sm:$0xf]
  %v1616 = vld [vmem:[%s19 + $0x32c] sm:$0xff]
  %v1617 = vld [vmem:[%s19 + $0x334] sm:$0xff]
  %v1618 = vld [vmem:[%s19 + $0x33c] sm:$0xff]
  %v1619 = vld [vmem:[%s19 + $0x344] sm:$0xf]
  %v1620 = vld [vmem:[%s19 + $0x348] sm:$0xff]
  %v1621 = vld [vmem:[%s19 + $0x350] sm:$0xff]
  %v1622 = vld [vmem:[%s19 + $0x358] sm:$0xff]
  %v1623 = vld [vmem:[%s19 + $0x360] sm:$0xf]
  %v1624 = vld [vmem:[%s19 + $0x364] sm:$0xff]
  %v1625 = vld [vmem:[%s19 + $0x36c] sm:$0xff]
  %v1626 = vld [vmem:[%s19 + $0x374] sm:$0xff]
  %v1627 = vld [vmem:[%s19 + $0x37c] sm:$0xf]
  %v1628 = vld [vmem:[%s20] sm:$0x7f]
  %v1630 = vperm.slane %v1628, 0
  %v1631 = vperm.slane %v1628, 1
  %v1632 = vperm.slane %v1628, 2
  %v1633 = vperm.slane %v1628, 3
  %v1634 = vperm.slane %v1628, 4
  %v1635 = vperm.slane %v1628, 5
  %v1636 = vperm.slane %v1628, 6
  %v1772 = vunpack.c.l.b16 %v1500
  %v1773 = vunpack.c.h.b16 %v1500
  %v1774 = vunpack.c.l.b16 %v1501
  %v1775 = vunpack.c.h.b16 %v1501
  %v1776 = vunpack.c.l.b16 %v1502
  %v1777 = vunpack.c.h.b16 %v1502
  %v1778 = vunpack.c.l.b16 %v1503
  %v1779 = vunpack.c.l.b16 %v1504
  %v1780 = vunpack.c.h.b16 %v1504
  %v1781 = vunpack.c.l.b16 %v1505
  %v1782 = vunpack.c.h.b16 %v1505
  %v1783 = vunpack.c.l.b16 %v1506
  %v1784 = vunpack.c.h.b16 %v1506
  %v1785 = vunpack.c.l.b16 %v1507
  %v1786 = vunpack.c.l.b16 %v1508
  %v1787 = vunpack.c.h.b16 %v1508
  %v1788 = vunpack.c.l.b16 %v1509
  %v1789 = vunpack.c.h.b16 %v1509
  %v1790 = vunpack.c.l.b16 %v1510
  %v1791 = vunpack.c.h.b16 %v1510
  %v1792 = vunpack.c.l.b16 %v1511
  %v1793 = vunpack.c.l.b16 %v1512
  %v1794 = vunpack.c.h.b16 %v1512
  %v1795 = vunpack.c.l.b16 %v1513
  %v1796 = vunpack.c.h.b16 %v1513
  %v1797 = vunpack.c.l.b16 %v1514
  %v1798 = vunpack.c.h.b16 %v1514
  %v1799 = vunpack.c.l.b16 %v1515
  %v1800 = vunpack.c.l.b16 %v1516
  %v1801 = vunpack.c.h.b16 %v1516
  %v1802 = vunpack.c.l.b16 %v1517
  %v1803 = vunpack.c.h.b16 %v1517
  %v1804 = vunpack.c.l.b16 %v1518
  %v1805 = vunpack.c.h.b16 %v1518
  %v1806 = vunpack.c.l.b16 %v1519
  %v1807 = vunpack.c.l.b16 %v1520
  %v1808 = vunpack.c.h.b16 %v1520
  %v1809 = vunpack.c.l.b16 %v1521
  %v1810 = vunpack.c.h.b16 %v1521
  %v1811 = vunpack.c.l.b16 %v1522
  %v1812 = vunpack.c.h.b16 %v1522
  %v1813 = vunpack.c.l.b16 %v1523
  %v1814 = vunpack.c.l.b16 %v1524
  %v1815 = vunpack.c.h.b16 %v1524
  %v1816 = vunpack.c.l.b16 %v1525
  %v1817 = vunpack.c.h.b16 %v1525
  %v1818 = vunpack.c.l.b16 %v1526
  %v1819 = vunpack.c.h.b16 %v1526
  %v1820 = vunpack.c.l.b16 %v1527
  %v1821 = vunpack.c.l.b16 %v1528
  %v1822 = vunpack.c.h.b16 %v1528
  %v1823 = vunpack.c.l.b16 %v1529
  %v1824 = vunpack.c.h.b16 %v1529
  %v1825 = vunpack.c.l.b16 %v1530
  %v1826 = vunpack.c.h.b16 %v1530
  %v1827 = vunpack.c.l.b16 %v1531
  %v1828 = vunpack.c.l.b16 %v1532
  %v1829 = vunpack.c.h.b16 %v1532
  %v1830 = vunpack.c.l.b16 %v1533
  %v1831 = vunpack.c.h.b16 %v1533
  %v1832 = vunpack.c.l.b16 %v1534
  %v1833 = vunpack.c.h.b16 %v1534
  %v1834 = vunpack.c.l.b16 %v1535
  %v1835 = vunpack.c.l.b16 %v1536
  %v1836 = vunpack.c.h.b16 %v1536
  %v1837 = vunpack.c.l.b16 %v1537
  %v1838 = vunpack.c.h.b16 %v1537
  %v1839 = vunpack.c.l.b16 %v1538
  %v1840 = vunpack.c.h.b16 %v1538
  %v1841 = vunpack.c.l.b16 %v1539
  %v1842 = vunpack.c.l.b16 %v1540
  %v1843 = vunpack.c.h.b16 %v1540
  %v1844 = vunpack.c.l.b16 %v1541
  %v1845 = vunpack.c.h.b16 %v1541
  %v1846 = vunpack.c.l.b16 %v1542
  %v1847 = vunpack.c.h.b16 %v1542
  %v1848 = vunpack.c.l.b16 %v1543
  %v1849 = vunpack.c.l.b16 %v1544
  %v1850 = vunpack.c.h.b16 %v1544
  %v1851 = vunpack.c.l.b16 %v1545
  %v1852 = vunpack.c.h.b16 %v1545
  %v1853 = vunpack.c.l.b16 %v1546
  %v1854 = vunpack.c.h.b16 %v1546
  %v1855 = vunpack.c.l.b16 %v1547
  %v1856 = vunpack.c.l.b16 %v1548
  %v1857 = vunpack.c.h.b16 %v1548
  %v1858 = vunpack.c.l.b16 %v1549
  %v1859 = vunpack.c.h.b16 %v1549
  %v1860 = vunpack.c.l.b16 %v1550
  %v1861 = vunpack.c.h.b16 %v1550
  %v1862 = vunpack.c.l.b16 %v1551
  %v1863 = vunpack.c.l.b16 %v1552
  %v1864 = vunpack.c.h.b16 %v1552
  %v1865 = vunpack.c.l.b16 %v1553
  %v1866 = vunpack.c.h.b16 %v1553
  %v1867 = vunpack.c.l.b16 %v1554
  %v1868 = vunpack.c.h.b16 %v1554
  %v1869 = vunpack.c.l.b16 %v1555
  %v1870 = vunpack.c.l.b16 %v1556
  %v1871 = vunpack.c.h.b16 %v1556
  %v1872 = vunpack.c.l.b16 %v1557
  %v1873 = vunpack.c.h.b16 %v1557
  %v1874 = vunpack.c.l.b16 %v1558
  %v1875 = vunpack.c.h.b16 %v1558
  %v1876 = vunpack.c.l.b16 %v1559
  %v1877 = vunpack.c.l.b16 %v1560
  %v1878 = vunpack.c.h.b16 %v1560
  %v1879 = vunpack.c.l.b16 %v1561
  %v1880 = vunpack.c.h.b16 %v1561
  %v1881 = vunpack.c.l.b16 %v1562
  %v1882 = vunpack.c.h.b16 %v1562
  %v1883 = vunpack.c.l.b16 %v1563
  %v1884 = vunpack.c.l.b16 %v1564
  %v1885 = vunpack.c.h.b16 %v1564
  %v1886 = vunpack.c.l.b16 %v1565
  %v1887 = vunpack.c.h.b16 %v1565
  %v1888 = vunpack.c.l.b16 %v1566
  %v1889 = vunpack.c.h.b16 %v1566
  %v1890 = vunpack.c.l.b16 %v1567
  %v1891 = vunpack.c.l.b16 %v1568
  %v1892 = vunpack.c.h.b16 %v1568
  %v1893 = vunpack.c.l.b16 %v1569
  %v1894 = vunpack.c.h.b16 %v1569
  %v1895 = vunpack.c.l.b16 %v1570
  %v1896 = vunpack.c.h.b16 %v1570
  %v1897 = vunpack.c.l.b16 %v1571
  %v1898 = vunpack.c.l.b16 %v1572
  %v1899 = vunpack.c.h.b16 %v1572
  %v1900 = vunpack.c.l.b16 %v1573
  %v1901 = vunpack.c.h.b16 %v1573
  %v1902 = vunpack.c.l.b16 %v1574
  %v1903 = vunpack.c.h.b16 %v1574
  %v1904 = vunpack.c.l.b16 %v1575
  %v1905 = vunpack.c.l.b16 %v1576
  %v1906 = vunpack.c.h.b16 %v1576
  %v1907 = vunpack.c.l.b16 %v1577
  %v1908 = vunpack.c.h.b16 %v1577
  %v1909 = vunpack.c.l.b16 %v1578
  %v1910 = vunpack.c.h.b16 %v1578
  %v1911 = vunpack.c.l.b16 %v1579
  %v1912 = vunpack.c.l.b16 %v1580
  %v1913 = vunpack.c.h.b16 %v1580
  %v1914 = vunpack.c.l.b16 %v1581
  %v1915 = vunpack.c.h.b16 %v1581
  %v1916 = vunpack.c.l.b16 %v1582
  %v1917 = vunpack.c.h.b16 %v1582
  %v1918 = vunpack.c.l.b16 %v1583
  %v1919 = vunpack.c.l.b16 %v1584
  %v1920 = vunpack.c.h.b16 %v1584
  %v1921 = vunpack.c.l.b16 %v1585
  %v1922 = vunpack.c.h.b16 %v1585
  %v1923 = vunpack.c.l.b16 %v1586
  %v1924 = vunpack.c.h.b16 %v1586
  %v1925 = vunpack.c.l.b16 %v1587
  %v1926 = vunpack.c.l.b16 %v1588
  %v1927 = vunpack.c.h.b16 %v1588
  %v1928 = vunpack.c.l.b16 %v1589
  %v1929 = vunpack.c.h.b16 %v1589
  %v1930 = vunpack.c.l.b16 %v1590
  %v1931 = vunpack.c.h.b16 %v1590
  %v1932 = vunpack.c.l.b16 %v1591
  %v1933 = vunpack.c.l.b16 %v1592
  %v1934 = vunpack.c.h.b16 %v1592
  %v1935 = vunpack.c.l.b16 %v1593
  %v1936 = vunpack.c.h.b16 %v1593
  %v1937 = vunpack.c.l.b16 %v1594
  %v1938 = vunpack.c.h.b16 %v1594
  %v1939 = vunpack.c.l.b16 %v1595
  %v1940 = vunpack.c.l.b16 %v1596
  %v1941 = vunpack.c.h.b16 %v1596
  %v1942 = vunpack.c.l.b16 %v1597
  %v1943 = vunpack.c.h.b16 %v1597
  %v1944 = vunpack.c.l.b16 %v1598
  %v1945 = vunpack.c.h.b16 %v1598
  %v1946 = vunpack.c.l.b16 %v1599
  %v1947 = vunpack.c.l.b16 %v1600
  %v1948 = vunpack.c.h.b16 %v1600
  %v1949 = vunpack.c.l.b16 %v1601
  %v1950 = vunpack.c.h.b16 %v1601
  %v1951 = vunpack.c.l.b16 %v1602
  %v1952 = vunpack.c.h.b16 %v1602
  %v1953 = vunpack.c.l.b16 %v1603
  %v1954 = vunpack.c.l.b16 %v1604
  %v1955 = vunpack.c.h.b16 %v1604
  %v1956 = vunpack.c.l.b16 %v1605
  %v1957 = vunpack.c.h.b16 %v1605
  %v1958 = vunpack.c.l.b16 %v1606
  %v1959 = vunpack.c.h.b16 %v1606
  %v1960 = vunpack.c.l.b16 %v1607
  %v1961 = vunpack.c.l.b16 %v1608
  %v1962 = vunpack.c.h.b16 %v1608
  %v1963 = vunpack.c.l.b16 %v1609
  %v1964 = vunpack.c.h.b16 %v1609
  %v1965 = vunpack.c.l.b16 %v1610
  %v1966 = vunpack.c.h.b16 %v1610
  %v1967 = vunpack.c.l.b16 %v1611
  %v1968 = vunpack.c.l.b16 %v1612
  %v1969 = vunpack.c.h.b16 %v1612
  %v1970 = vunpack.c.l.b16 %v1613
  %v1971 = vunpack.c.h.b16 %v1613
  %v1972 = vunpack.c.l.b16 %v1614
  %v1973 = vunpack.c.h.b16 %v1614
  %v1974 = vunpack.c.l.b16 %v1615
  %v1975 = vunpack.c.l.b16 %v1616
  %v1976 = vunpack.c.h.b16 %v1616
  %v1977 = vunpack.c.l.b16 %v1617
  %v1978 = vunpack.c.h.b16 %v1617
  %v1979 = vunpack.c.l.b16 %v1618
  %v1980 = vunpack.c.h.b16 %v1618
  %v1981 = vunpack.c.l.b16 %v1619
  %v1982 = vunpack.c.l.b16 %v1620
  %v1983 = vunpack.c.h.b16 %v1620
  %v1984 = vunpack.c.l.b16 %v1621
  %v1985 = vunpack.c.h.b16 %v1621
  %v1986 = vunpack.c.l.b16 %v1622
  %v1987 = vunpack.c.h.b16 %v1622
  %v1988 = vunpack.c.l.b16 %v1623
  %v1989 = vunpack.c.l.b16 %v1624
  %v1990 = vunpack.c.h.b16 %v1624
  %v1991 = vunpack.c.l.b16 %v1625
  %v1992 = vunpack.c.h.b16 %v1625
  %v1993 = vunpack.c.l.b16 %v1626
  %v1994 = vunpack.c.h.b16 %v1626
  %v1995 = vunpack.c.l.b16 %v1627
  %v1996 = vpack.c.b16 %v1779, %v1772
  %v1997 = vpack.c.b16 %v1780, %v1773
  %v1998 = vpack.c.b16 %v1781, %v1774
  %v1999 = vpack.c.b16 %v1782, %v1775
  %v2000 = vpack.c.b16 %v1783, %v1776
  %v2001 = vpack.c.b16 %v1784, %v1777
  %v2002 = vpack.c.b16 %v1785, %v1778
  %v2003 = vpack.c.b16 %v1793, %v1786
  %v2004 = vpack.c.b16 %v1794, %v1787
  %v2005 = vpack.c.b16 %v1795, %v1788
  %v2006 = vpack.c.b16 %v1796, %v1789
  %v2007 = vpack.c.b16 %v1797, %v1790
  %v2008 = vpack.c.b16 %v1798, %v1791
  %v2009 = vpack.c.b16 %v1799, %v1792
  %v2010 = vpack.c.b16 %v1807, %v1800
  %v2011 = vpack.c.b16 %v1808, %v1801
  %v2012 = vpack.c.b16 %v1809, %v1802
  %v2013 = vpack.c.b16 %v1810, %v1803
  %v2014 = vpack.c.b16 %v1811, %v1804
  %v2015 = vpack.c.b16 %v1812, %v1805
  %v2016 = vpack.c.b16 %v1813, %v1806
  %v2017 = vpack.c.b16 %v1821, %v1814
  %v2018 = vpack.c.b16 %v1822, %v1815
  %v2019 = vpack.c.b16 %v1823, %v1816
  %v2020 = vpack.c.b16 %v1824, %v1817
  %v2021 = vpack.c.b16 %v1825, %v1818
  %v2022 = vpack.c.b16 %v1826, %v1819
  %v2023 = vpack.c.b16 %v1827, %v1820
  %v2024 = vpack.c.b16 %v1835, %v1828
  %v2025 = vpack.c.b16 %v1836, %v1829
  %v2026 = vpack.c.b16 %v1837, %v1830
  %v2027 = vpack.c.b16 %v1838, %v1831
  %v2028 = vpack.c.b16 %v1839, %v1832
  %v2029 = vpack.c.b16 %v1840, %v1833
  %v2030 = vpack.c.b16 %v1841, %v1834
  %v2031 = vpack.c.b16 %v1849, %v1842
  %v2032 = vpack.c.b16 %v1850, %v1843
  %v2033 = vpack.c.b16 %v1851, %v1844
  %v2034 = vpack.c.b16 %v1852, %v1845
  %v2035 = vpack.c.b16 %v1853, %v1846
  %v2036 = vpack.c.b16 %v1854, %v1847
  %v2037 = vpack.c.b16 %v1855, %v1848
  %v2038 = vpack.c.b16 %v1863, %v1856
  %v2039 = vpack.c.b16 %v1864, %v1857
  %v2040 = vpack.c.b16 %v1865, %v1858
  %v2041 = vpack.c.b16 %v1866, %v1859
  %v2042 = vpack.c.b16 %v1867, %v1860
  %v2043 = vpack.c.b16 %v1868, %v1861
  %v2044 = vpack.c.b16 %v1869, %v1862
  %v2045 = vpack.c.b16 %v1877, %v1870
  %v2046 = vpack.c.b16 %v1878, %v1871
  %v2047 = vpack.c.b16 %v1879, %v1872
  %v2048 = vpack.c.b16 %v1880, %v1873
  %v2049 = vpack.c.b16 %v1881, %v1874
  %v2050 = vpack.c.b16 %v1882, %v1875
  %v2051 = vpack.c.b16 %v1883, %v1876
  %v2052 = vpack.c.b16 %v1891, %v1884
  %v2053 = vpack.c.b16 %v1892, %v1885
  %v2054 = vpack.c.b16 %v1893, %v1886
  %v2055 = vpack.c.b16 %v1894, %v1887
  %v2056 = vpack.c.b16 %v1895, %v1888
  %v2057 = vpack.c.b16 %v1896, %v1889
  %v2058 = vpack.c.b16 %v1897, %v1890
  %v2059 = vpack.c.b16 %v1905, %v1898
  %v2060 = vpack.c.b16 %v1906, %v1899
  %v2061 = vpack.c.b16 %v1907, %v1900
  %v2062 = vpack.c.b16 %v1908, %v1901
  %v2063 = vpack.c.b16 %v1909, %v1902
  %v2064 = vpack.c.b16 %v1910, %v1903
  %v2065 = vpack.c.b16 %v1911, %v1904
  %v2066 = vpack.c.b16 %v1919, %v1912
  %v2067 = vpack.c.b16 %v1920, %v1913
  %v2068 = vpack.c.b16 %v1921, %v1914
  %v2069 = vpack.c.b16 %v1922, %v1915
  %v2070 = vpack.c.b16 %v1923, %v1916
  %v2071 = vpack.c.b16 %v1924, %v1917
  %v2072 = vpack.c.b16 %v1925, %v1918
  %v2073 = vpack.c.b16 %v1933, %v1926
  %v2074 = vpack.c.b16 %v1934, %v1927
  %v2075 = vpack.c.b16 %v1935, %v1928
  %v2076 = vpack.c.b16 %v1936, %v1929
  %v2077 = vpack.c.b16 %v1937, %v1930
  %v2078 = vpack.c.b16 %v1938, %v1931
  %v2079 = vpack.c.b16 %v1939, %v1932
  %v2080 = vpack.c.b16 %v1947, %v1940
  %v2081 = vpack.c.b16 %v1948, %v1941
  %v2082 = vpack.c.b16 %v1949, %v1942
  %v2083 = vpack.c.b16 %v1950, %v1943
  %v2084 = vpack.c.b16 %v1951, %v1944
  %v2085 = vpack.c.b16 %v1952, %v1945
  %v2086 = vpack.c.b16 %v1953, %v1946
  %v2087 = vpack.c.b16 %v1961, %v1954
  %v2088 = vpack.c.b16 %v1962, %v1955
  %v2089 = vpack.c.b16 %v1963, %v1956
  %v2090 = vpack.c.b16 %v1964, %v1957
  %v2091 = vpack.c.b16 %v1965, %v1958
  %v2092 = vpack.c.b16 %v1966, %v1959
  %v2093 = vpack.c.b16 %v1967, %v1960
  %v2094 = vpack.c.b16 %v1975, %v1968
  %v2095 = vpack.c.b16 %v1976, %v1969
  %v2096 = vpack.c.b16 %v1977, %v1970
  %v2097 = vpack.c.b16 %v1978, %v1971
  %v2098 = vpack.c.b16 %v1979, %v1972
  %v2099 = vpack.c.b16 %v1980, %v1973
  %v2100 = vpack.c.b16 %v1981, %v1974
  %v2101 = vpack.c.b16 %v1989, %v1982
  %v2102 = vpack.c.b16 %v1990, %v1983
  %v2103 = vpack.c.b16 %v1991, %v1984
  %v2104 = vpack.c.b16 %v1992, %v1985
  %v2105 = vpack.c.b16 %v1993, %v1986
  %v2106 = vpack.c.b16 %v1994, %v1987
  %v2107 = vpack.c.b16 %v1995, %v1988
  %2220 = vmatpush.bf16.msra.mxu0 %v2045
  %2221 = vmatpush.bf16.msra.mxu0 %v2038
  %2222 = vmatpush.bf16.msra.mxu0 %v2031
  %2223 = vmatpush.bf16.msra.mxu0 %v2024
  %2224 = vmatpush.bf16.msra.mxu0 %v2017
  %2225 = vmatpush.bf16.msra.mxu0 %v2010
  %2226 = vmatpush.bf16.msra.mxu0 %v2003
  %2227 = vmatpush.bf16.msra.mxu0 %v1996
  %2228 = vmatmul.bf16.gmra.mxu0 %v1498
  %v2229 = vpop.f32.mrf.mxu0
  %v2230 = vadd.f32 %v1630, %v2229
  %v2231 = vpop.f32.mrf.mxu0
  %v2232 = vadd.f32 %v1630, %v2231
  %2233 = vdwg.mxu0
  %2234 = vmatpush.bf16.msra.mxu0 %v2101
  %2235 = vmatpush.bf16.msra.mxu0 %v2094
  %2236 = vmatpush.bf16.msra.mxu0 %v2087
  %2237 = vmatpush.bf16.msra.mxu0 %v2080
  %2238 = vmatpush.bf16.msra.mxu0 %v2073
  %2239 = vmatpush.bf16.msra.mxu0 %v2066
  %2240 = vmatpush.bf16.msra.mxu0 %v2059
  %2241 = vmatpush.bf16.msra.mxu0 %v2052
  %2242 = vmatmul.bf16.gmra.mxu0 %v1499
  %v2243 = vpop.f32.mrf.mxu0
  %v2244 = vadd.f32 %v2230, %v2243
  %v2245 = vpop.f32.mrf.mxu0
  %v2246 = vadd.f32 %v2232, %v2245
  %2247 = vdwg.mxu0
  %2248 = vmatpush.bf16.msra.mxu0 %v2046
  %2249 = vmatpush.bf16.msra.mxu0 %v2039
  %2250 = vmatpush.bf16.msra.mxu0 %v2032
  %2251 = vmatpush.bf16.msra.mxu0 %v2025
  %2252 = vmatpush.bf16.msra.mxu0 %v2018
  %2253 = vmatpush.bf16.msra.mxu0 %v2011
  %2254 = vmatpush.bf16.msra.mxu0 %v2004
  %2255 = vmatpush.bf16.msra.mxu0 %v1997
  %2256 = vmatmul.bf16.gmra.mxu0 %v1498
  %v2257 = vpop.f32.mrf.mxu0
  %v2258 = vadd.f32 %v1631, %v2257
  %v2259 = vpop.f32.mrf.mxu0
  %v2260 = vadd.f32 %v1631, %v2259
  %2261 = vdwg.mxu0
  %2262 = vmatpush.bf16.msra.mxu0 %v2102
  %2263 = vmatpush.bf16.msra.mxu0 %v2095
  %2264 = vmatpush.bf16.msra.mxu0 %v2088
  %2265 = vmatpush.bf16.msra.mxu0 %v2081
  %2266 = vmatpush.bf16.msra.mxu0 %v2074
  %2267 = vmatpush.bf16.msra.mxu0 %v2067
  %2268 = vmatpush.bf16.msra.mxu0 %v2060
  %2269 = vmatpush.bf16.msra.mxu0 %v2053
  %2270 = vmatmul.bf16.gmra.mxu0 %v1499
  %v2271 = vpop.f32.mrf.mxu0
  %v2272 = vadd.f32 %v2258, %v2271
  %v2273 = vpop.f32.mrf.mxu0
  %v2274 = vadd.f32 %v2260, %v2273
  %2275 = vdwg.mxu0
  %2276 = vmatpush.bf16.msra.mxu0 %v2047
  %2277 = vmatpush.bf16.msra.mxu0 %v2040
  %2278 = vmatpush.bf16.msra.mxu0 %v2033
  %2279 = vmatpush.bf16.msra.mxu0 %v2026
  %2280 = vmatpush.bf16.msra.mxu0 %v2019
  %2281 = vmatpush.bf16.msra.mxu0 %v2012
  %2282 = vmatpush.bf16.msra.mxu0 %v2005
  %2283 = vmatpush.bf16.msra.mxu0 %v1998
  %2284 = vmatmul.bf16.gmra.mxu0 %v1498
  %v2285 = vpop.f32.mrf.mxu0
  %v2286 = vadd.f32 %v1632, %v2285
  %v2287 = vpop.f32.mrf.mxu0
  %v2288 = vadd.f32 %v1632, %v2287
  %2289 = vdwg.mxu0
  %2290 = vmatpush.bf16.msra.mxu0 %v2103
  %2291 = vmatpush.bf16.msra.mxu0 %v2096
  %2292 = vmatpush.bf16.msra.mxu0 %v2089
  %2293 = vmatpush.bf16.msra.mxu0 %v2082
  %2294 = vmatpush.bf16.msra.mxu0 %v2075
  %2295 = vmatpush.bf16.msra.mxu0 %v2068
  %2296 = vmatpush.bf16.msra.mxu0 %v2061
  %2297 = vmatpush.bf16.msra.mxu0 %v2054
  %2298 = vmatmul.bf16.gmra.mxu0 %v1499
  %v2299 = vpop.f32.mrf.mxu0
  %v2300 = vadd.f32 %v2286, %v2299
  %v2301 = vpop.f32.mrf.mxu0
  %v2302 = vadd.f32 %v2288, %v2301
  %2303 = vdwg.mxu0
  %2304 = vmatpush.bf16.msra.mxu0 %v2048
  %2305 = vmatpush.bf16.msra.mxu0 %v2041
  %2306 = vmatpush.bf16.msra.mxu0 %v2034
  %2307 = vmatpush.bf16.msra.mxu0 %v2027
  %2308 = vmatpush.bf16.msra.mxu0 %v2020
  %2309 = vmatpush.bf16.msra.mxu0 %v2013
  %2310 = vmatpush.bf16.msra.mxu0 %v2006
  %2311 = vmatpush.bf16.msra.mxu0 %v1999
  %2312 = vmatmul.bf16.gmra.mxu0 %v1498
  %v2313 = vpop.f32.mrf.mxu0
  %v2314 = vadd.f32 %v1633, %v2313
  %v2315 = vpop.f32.mrf.mxu0
  %v2316 = vadd.f32 %v1633, %v2315
  %2317 = vdwg.mxu0
  %2318 = vmatpush.bf16.msra.mxu0 %v2104
  %2319 = vmatpush.bf16.msra.mxu0 %v2097
  %2320 = vmatpush.bf16.msra.mxu0 %v2090
  %2321 = vmatpush.bf16.msra.mxu0 %v2083
  %2322 = vmatpush.bf16.msra.mxu0 %v2076
  %2323 = vmatpush.bf16.msra.mxu0 %v2069
  %2324 = vmatpush.bf16.msra.mxu0 %v2062
  %2325 = vmatpush.bf16.msra.mxu0 %v2055
  %2326 = vmatmul.bf16.gmra.mxu0 %v1499
  %v2327 = vpop.f32.mrf.mxu0
  %v2328 = vadd.f32 %v2314, %v2327
  %v2329 = vpop.f32.mrf.mxu0
  %v2330 = vadd.f32 %v2316, %v2329
  %2331 = vdwg.mxu0
  %2332 = vmatpush.bf16.msra.mxu0 %v2049
  %2333 = vmatpush.bf16.msra.mxu0 %v2042
  %2334 = vmatpush.bf16.msra.mxu0 %v2035
  %2335 = vmatpush.bf16.msra.mxu0 %v2028
  %2336 = vmatpush.bf16.msra.mxu0 %v2021
  %2337 = vmatpush.bf16.msra.mxu0 %v2014
  %2338 = vmatpush.bf16.msra.mxu0 %v2007
  %2339 = vmatpush.bf16.msra.mxu0 %v2000
  %2340 = vmatmul.bf16.gmra.mxu0 %v1498
  %v2341 = vpop.f32.mrf.mxu0
  %v2342 = vadd.f32 %v1634, %v2341
  %v2343 = vpop.f32.mrf.mxu0
  %v2344 = vadd.f32 %v1634, %v2343
  %2345 = vdwg.mxu0
  %2346 = vmatpush.bf16.msra.mxu0 %v2105
  %2347 = vmatpush.bf16.msra.mxu0 %v2098
  %2348 = vmatpush.bf16.msra.mxu0 %v2091
  %2349 = vmatpush.bf16.msra.mxu0 %v2084
  %2350 = vmatpush.bf16.msra.mxu0 %v2077
  %2351 = vmatpush.bf16.msra.mxu0 %v2070
  %2352 = vmatpush.bf16.msra.mxu0 %v2063
  %2353 = vmatpush.bf16.msra.mxu0 %v2056
  %2354 = vmatmul.bf16.gmra.mxu0 %v1499
  %v2355 = vpop.f32.mrf.mxu0
  %v2356 = vadd.f32 %v2342, %v2355
  %v2357 = vpop.f32.mrf.mxu0
  %v2358 = vadd.f32 %v2344, %v2357
  %2359 = vdwg.mxu0
  %2360 = vmatpush.bf16.msra.mxu0 %v2050
  %2361 = vmatpush.bf16.msra.mxu0 %v2043
  %2362 = vmatpush.bf16.msra.mxu0 %v2036
  %2363 = vmatpush.bf16.msra.mxu0 %v2029
  %2364 = vmatpush.bf16.msra.mxu0 %v2022
  %2365 = vmatpush.bf16.msra.mxu0 %v2015
  %2366 = vmatpush.bf16.msra.mxu0 %v2008
  %2367 = vmatpush.bf16.msra.mxu0 %v2001
  %2368 = vmatmul.bf16.gmra.mxu0 %v1498
  %v2369 = vpop.f32.mrf.mxu0
  %v2370 = vadd.f32 %v1635, %v2369
  %v2371 = vpop.f32.mrf.mxu0
  %v2372 = vadd.f32 %v1635, %v2371
  %2373 = vdwg.mxu0
  %2374 = vmatpush.bf16.msra.mxu0 %v2106
  %2375 = vmatpush.bf16.msra.mxu0 %v2099
  %2376 = vmatpush.bf16.msra.mxu0 %v2092
  %2377 = vmatpush.bf16.msra.mxu0 %v2085
  %2378 = vmatpush.bf16.msra.mxu0 %v2078
  %2379 = vmatpush.bf16.msra.mxu0 %v2071
  %2380 = vmatpush.bf16.msra.mxu0 %v2064
  %2381 = vmatpush.bf16.msra.mxu0 %v2057
  %2382 = vmatmul.bf16.gmra.mxu0 %v1499
  %v2383 = vpop.f32.mrf.mxu0
  %v2384 = vadd.f32 %v2370, %v2383
  %v2385 = vpop.f32.mrf.mxu0
  %v2386 = vadd.f32 %v2372, %v2385
  %2387 = vdwg.mxu0
  %2388 = vmatpush.bf16.msra.mxu0 %v2051
  %2389 = vmatpush.bf16.msra.mxu0 %v2044
  %2390 = vmatpush.bf16.msra.mxu0 %v2037
  %2391 = vmatpush.bf16.msra.mxu0 %v2030
  %2392 = vmatpush.bf16.msra.mxu0 %v2023
  %2393 = vmatpush.bf16.msra.mxu0 %v2016
  %2394 = vmatpush.bf16.msra.mxu0 %v2009
  %2395 = vmatpush.bf16.msra.mxu0 %v2002
  %2396 = vmatmul.bf16.gmra.mxu0 %v1498
  %v2397 = vpop.f32.mrf.mxu0
  %v2398 = vadd.f32 %v1636, %v2397
  %v2399 = vpop.f32.mrf.mxu0
  %v2400 = vadd.f32 %v1636, %v2399
  %2401 = vdwg.mxu0
  %2402 = vmatpush.bf16.msra.mxu0 %v2107
  %2403 = vmatpush.bf16.msra.mxu0 %v2100
  %2404 = vmatpush.bf16.msra.mxu0 %v2093
  %2405 = vmatpush.bf16.msra.mxu0 %v2086
  %2406 = vmatpush.bf16.msra.mxu0 %v2079
  %2407 = vmatpush.bf16.msra.mxu0 %v2072
  %2408 = vmatpush.bf16.msra.mxu0 %v2065
  %2409 = vmatpush.bf16.msra.mxu0 %v2058
  %2410 = vmatmul.bf16.gmra.mxu0 %v1499
  %v2411 = vpop.f32.mrf.mxu0
  %v2412 = vadd.f32 %v2398, %v2411
  %v2413 = vpop.f32.mrf.mxu0
  %v2414 = vadd.f32 %v2400, %v2413
  %2415 = vdwg.mxu0
  %v2416 = vmax.f32 %v2244, 0.0
  %v2417 = vmax.f32 %v2272, 0.0
  %v2418 = vmax.f32 %v2300, 0.0
  %v2419 = vmax.f32 %v2328, 0.0
  %v2420 = vmax.f32 %v2356, 0.0
  %v2421 = vmax.f32 %v2384, 0.0
  %v2422 = vmax.f32 %v2412, 0.0
  %v2423 = vmax.f32 %v2246, 0.0
  %v2424 = vmax.f32 %v2274, 0.0
  %v2425 = vmax.f32 %v2302, 0.0
  %v2426 = vmax.f32 %v2330, 0.0
  %v2427 = vmax.f32 %v2358, 0.0
  %v2428 = vmax.f32 %v2386, 0.0
  %v2429 = vmax.f32 %v2414, 0.0
  %2430 = vst [vmem:[%s21] sm:$0xff] %v2416
  %2431 = vst [vmem:[%s21 + $0x8] sm:$0xff] %v2417
  %2432 = vst [vmem:[%s21 + $0x10] sm:$0xff] %v2418
  %2433 = vst [vmem:[%s21 + $0x18] sm:$0xff] %v2419
  %2434 = vst [vmem:[%s21 + $0x20] sm:$0xff] %v2420
  %2435 = vst [vmem:[%s21 + $0x28] sm:$0xff] %v2421
  %2436 = vst.msk [vmem:[%s21 + $0x30] sm:$0xff] %vm684, %v2422
  %2437 = vst [vmem:[%s21 + $0x38] sm:$0xff] %v2423
  %2438 = vst [vmem:[%s21 + $0x40] sm:$0xff] %v2424
  %2439 = vst [vmem:[%s21 + $0x48] sm:$0xff] %v2425
  %2440 = vst [vmem:[%s21 + $0x50] sm:$0xff] %v2426
  %2441 = vst [vmem:[%s21 + $0x58] sm:$0xff] %v2427
  %2442 = vst [vmem:[%s21 + $0x60] sm:$0xff] %v2428
  %2443 = vst.msk [vmem:[%s21 + $0x68] sm:$0xff] %vm684, %v2429
  // Predicated region
  $region86: #{sparse_autoencoder_forward.1} parent=0 // pred_check
    _
  $region87: #{sparse_autoencoder_forward.1} parent=0 // pred_check_branch
    %2445 = sbr.rel (0) target = $region89
  $region88: #{sparse_autoencoder_forward.1} parent=0 // pred_region
    _
  $region89: #{sparse_autoencoder_forward.1} parent=0 // pred_fallthru
    _
  // Predicated region
  $region90: #{sparse_autoencoder_forward.1} parent=0 // pred_check
    _
  $region91: #{sparse_autoencoder_forward.1} parent=0 // pred_check_branch
    %2447 = sbr.rel (0) target = $region93
  $region92: #{sparse_autoencoder_forward.1} parent=0 // pred_region
    _
  $region93: #{sparse_autoencoder_forward.1} parent=0 // pred_fallthru
    _

</llo_original>
